<compile_context>
chip_gen: v7x
topology: tpu7x:2x2x1
jax: 0.10.0
libtpu: 0.0.40
codegen_flags: <defaults>
</compile_context>

<pallas_src>
import functools

import jax
import jax.numpy as jnp
from jax import lax
from jax.experimental import pallas as pl
from jax.experimental.pallas import tpu as pltpu

BN_EPS = 1e-5
_LANE = 128          # TPU lane width
_LANE_TARGET = 512   # preferred lane-dense tile width (amortizes per-step cost)


def _round_up(x, m):
    return (x + m - 1) // m * m


def _pick_batch_block(batch, lseg, lane_target, min_grid):
    """Largest divisor of `batch` with folded lane width near the target,
    while keeping at least `min_grid` grid steps (megacore / DMA overlap)."""
    want = max(1, lane_target // lseg)
    if min_grid > 1:
        want = min(want, max(1, batch // min_grid))
    bb = max(1, min(batch, want))
    while batch % bb:
        bb -= 1
    return bb


def _tcn_fused_kernel(*refs, layer_meta, K, lseg, lane):
    """Whole TCN for one block of batch elements folded into the lane axis.

    refs (inputs):  x (Cp_in0, lane) f32, bias_all (total, 1) f32,
                    then per layer: w1 (Cp_out, K*Cp_in), w2 (Cp_out, K*Cp_out),
                    [wd (Cp_out, Cp_in)]  -- all in mxu dtype, BN folded in.
    refs (output):  o (Cp_out_last, lane)
    refs (scratch): stack (K*Cp_max, lane) mxu-dtype im2col buffer.
    """
    x_ref, bias_ref = refs[0], refs[1]
    o_ref, stack_ref = refs[-2], refs[-1]
    wrefs = refs[2:-2]

    bb = lane // lseg
    seg_pos = lax.broadcasted_iota(jnp.int32, (1, lane), 1)
    if bb > 1:
        seg_pos = seg_pos % lseg          # within-segment time index

    # Hoist the per-shift lane masks out of the layer loop (no re-broadcast).
    shifts = sorted({(K - 1 - k) * d
                     for d, *_ in layer_meta for k in range(K)} - {0})
    masks = {s: seg_pos >= s for s in shifts if s < lseg}

    def build_stack(a, cp, d):
        # Causal im2col: tap k pairs with the input shifted right by (K-1-k)*d
        # within each length-`lseg` segment (== left zero-pad + Chomp1d).
        for k in range(K):
            s = (K - 1 - k) * d
            if s == 0:
                v = a
            elif s >= lseg:
                # Shift exceeds the segment: this tap contributes nothing.
                v = jnp.zeros_like(a)
            else:
                # XLU rotate + one VALU select; the mask handles both the
                # zero-fill and cross-segment leakage when bb > 1.
                v = jnp.where(masks[s], pltpu.roll(a, shift=s, axis=1), 0.0)
            stack_ref[k * cp:(k + 1) * cp, :] = v.astype(stack_ref.dtype)

    x = x_ref[...].astype(jnp.float32)
    widx = 0
    for dil, has_ds, cp_in, cp_out, o1, o2, od in layer_meta:
        w1, w2 = wrefs[widx], wrefs[widx + 1]
        wd = wrefs[widx + 2] if has_ds else None
        widx += 3 if has_ds else 2

        # ---- conv1 (+ folded eval-BN) ----
        build_stack(x, cp_in, dil)
        h = jnp.dot(w1[...], stack_ref[0:K * cp_in, :],
                    preferred_element_type=jnp.float32) \
            + bias_ref[o1:o1 + cp_out, :]
        # 1x1 downsample residual: reuse the unshifted tap already cast into
        # the scratch (rows [(K-1)*cp_in, K*cp_in)), before conv2 overwrites it.
        if has_ds:
            res = jnp.dot(wd[...], stack_ref[(K - 1) * cp_in:K * cp_in, :],
                          preferred_element_type=jnp.float32) \
                  + bias_ref[od:od + cp_out, :]
        else:
            res = x
        h = jnp.maximum(h, 0.0)

        # ---- conv2 (+ folded eval-BN) ----
        build_stack(h, cp_out, dil)
        h = jnp.dot(w2[...], stack_ref[0:K * cp_out, :],
                    preferred_element_type=jnp.float32) \
            + bias_ref[o2:o2 + cp_out, :]
        h = jnp.maximum(h, 0.0)

        x = jnp.maximum(h + res, 0.0)     # residual add + final ReLU

    o_ref[...] = x.astype(o_ref.dtype)


def tcn_pallas(x, blocks, *, kernel_size, lane_target=_LANE_TARGET,
               mxu_dtype=jnp.bfloat16, min_grid_steps=2):
    """Fused TCN forward. x: (B, C_in, L); blocks: list of param dicts.

    mxu_dtype controls the MXU operand dtype (weights + im2col stack);
    accumulation and all elementwise math are f32. Output is in x.dtype.
    """
    B, c_in0, L = x.shape
    K = kernel_size
    out_dtype = x.dtype

    mxu_bytes = jnp.dtype(mxu_dtype).itemsize
    align = 8 if mxu_bytes == 4 else 16               # sublane packing alignment
    lseg = _round_up(max(L, _LANE), _LANE)            # lane-dense time / segment
    bb = _pick_batch_block(B, lseg, lane_target, min_grid_steps)
    lane = bb * lseg
    grid = (B // bb,)

    bn_scale = 1.0 / (1.0 + BN_EPS) ** 0.5            # eval BN: mean=0, var=1

    # ---- glue: (B, C, L) -> (Cp, B*lseg), channels padded to `align` ----
    # Right-padding time is safe (causality); padded channels stay zero
    # through every layer (zero weight columns/rows + zero bias + ReLU).
    cp_in0 = _round_up(c_in0, align)
    xt = jnp.transpose(x, (1, 0, 2)).astype(jnp.float32)
    xt = jnp.pad(xt, ((0, cp_in0 - c_in0), (0, 0), (0, lseg - L)))
    x_lanes = xt.reshape(cp_in0, B * lseg)

    def pad_w(w, co, ci):     # (c_out, c_in, K) -> (co, ci, K)
        return jnp.pad(w, ((0, co - w.shape[0]), (0, ci - w.shape[1]), (0, 0)))

    def pad_b(b, co):
        return jnp.pad(b, ((0, co - b.shape[0]),))

    weight_args, bias_chunks, layer_meta = [], [], []
    bias_off = 0
    cp_prev, c_prev = cp_in0, c_in0
    cp_max = cp_in0
    for li, p in enumerate(blocks):
        c_out = p["w1"].shape[0]
        cp_out = _round_up(c_out, align)
        cp_max = max(cp_max, cp_out)
        dil = 2 ** li
        has_ds = p["wd"] is not None

        # stack K taps k-major => contraction depth K*Cp; fold BN scale in.
        w1 = (jnp.transpose(pad_w(p["w1"], cp_out, cp_prev), (0, 2, 1))
              .reshape(cp_out, K * cp_prev) * bn_scale).astype(mxu_dtype)
        w2 = (jnp.transpose(pad_w(p["w2"], cp_out, cp_out), (0, 2, 1))
              .reshape(cp_out, K * cp_out) * bn_scale).astype(mxu_dtype)
        weight_args += [w1, w2]

        o1 = bias_off
        bias_chunks.append(pad_b(p["b1"], cp_out) * bn_scale); bias_off += cp_out
        o2 = bias_off
        bias_chunks.append(pad_b(p["b2"], cp_out) * bn_scale); bias_off += cp_out
        od = -1
        if has_ds:
            weight_args.append(
                pad_w(p["wd"], cp_out, cp_prev)[:, :, 0].astype(mxu_dtype))
            od = bias_off
            bias_chunks.append(pad_b(p["bd"], cp_out)); bias_off += cp_out

        layer_meta.append((dil, has_ds, cp_prev, cp_out, o1, o2, od))
        cp_prev, c_prev = cp_out, c_out

    bias_all = jnp.concatenate(bias_chunks).astype(jnp.float32)[:, None]

    kernel = functools.partial(_tcn_fused_kernel, layer_meta=tuple(layer_meta),
                               K=K, lseg=lseg, lane=lane)

    # ---- explicit VMEM budget (weights + buffers + scratch + activations) ----
    out_bytes = jnp.dtype(out_dtype).itemsize
    w_tot = sum(int(w.size) * mxu_bytes for w in weight_args)
    b_tot = _round_up(int(bias_all.shape[0]), 8) * 128 * 4
    est = (2 * cp_in0 * lane * 4                 # x block (double-buffered)
           + 2 * cp_prev * lane * out_bytes      # out block (double-buffered)
           + 2 * (w_tot + b_tot)                 # resident weights (worst case)
           + K * cp_max * lane * mxu_bytes       # im2col scratch
           + 4 * cp_max * lane * 4)              # live f32 activations
    vmem_limit = int(min(128 * 2 ** 20, max(32 * 2 ** 20, 2 * est)))

    x_spec = pl.BlockSpec((cp_in0, lane), lambda i: (0, i))
    out_spec = pl.BlockSpec((cp_prev, lane), lambda i: (0, i))
    out_shape = jax.ShapeDtypeStruct((cp_prev, B * lseg), out_dtype)
    scratch = [pltpu.VMEM((K * cp_max, lane), mxu_dtype)]

    def const_spec(a, mode):
        imap = lambda i, n=a.ndim: (0,) * n      # block index never changes
        if mode is None:
            return pl.BlockSpec(a.shape, imap)
        return pl.BlockSpec(a.shape, imap, pipeline_mode=mode)

    def run(mode):
        in_specs = ([x_spec, const_spec(bias_all, mode)]
                    + [const_spec(w, mode) for w in weight_args])
        return pl.pallas_call(
            kernel,
            out_shape=out_shape,
            grid=grid,
            in_specs=in_specs,
            out_specs=out_spec,
            scratch_shapes=scratch,
            compiler_params=pltpu.CompilerParams(
                dimension_semantics=("parallel",),   # batch blocks independent
                vmem_limit_bytes=vmem_limit),
        )(x_lanes, bias_all, *weight_args)

    try:
        # Single-buffer the constant-index weights/biases (halves their VMEM).
        out = run(pl.Buffered(1))
    except Exception:
        out = run(None)   # fallback if Buffered(1) is unsupported here

    y = out.reshape(cp_prev, B, lseg)[:c_prev, :, :L]
    return jnp.transpose(y, (1, 0, 2))


# ---------------- pure-JAX reference (independent check) ----------------
def tcn_ref(x, blocks, *, kernel_size):
    bn_scale = 1.0 / (1.0 + BN_EPS) ** 0.5
    for i, p in enumerate(blocks):
        d = 2 ** i
        pad = (kernel_size - 1) * d

        def cconv(inp, w, b, dil, lp):
            y = lax.conv_general_dilated(
                inp, w, window_strides=(1,), padding=[(lp, 0)],
                rhs_dilation=(dil,), dimension_numbers=('NCH', 'OIH', 'NCH'))
            return y + b[None, :, None]

        h = jax.nn.relu(cconv(x, p["w1"], p["b1"], d, pad) * bn_scale)
        h = jax.nn.relu(cconv(h, p["w2"], p["b2"], d, pad) * bn_scale)
        if p["wd"] is not None:
            res = cconv(x, p["wd"], p["bd"], 1, 0)
        else:
            res = x
        x = jax.nn.relu(h + res)
    return x


# ---------------- deterministic parameter init ----------------
def init_params(key, num_inputs, num_channels, kernel_size):
    blocks = []
    c_in = num_inputs
    for c_out in num_channels:
        key, k1, k2, k3, k4, k5, k6 = jax.random.split(key, 7)
        w1 = 0.01 * jax.random.normal(k1, (c_out, c_in, kernel_size), jnp.float32)
        b1 = 0.05 * jax.random.normal(k2, (c_out,), jnp.float32)
        w2 = 0.01 * jax.random.normal(k3, (c_out, c_out, kernel_size), jnp.float32)
        b2 = 0.05 * jax.random.normal(k4, (c_out,), jnp.float32)
        if c_in != c_out:
            wd = 0.01 * jax.random.normal(k5, (c_out, c_in, 1), jnp.float32)
            bd = 0.05 * jax.random.normal(k6, (c_out,), jnp.float32)
        else:
            wd, bd = None, None
        blocks.append(dict(w1=w1, b1=b1, w2=w2, b2=b2, wd=wd, bd=bd))
        c_in = c_out
    return blocks


if __name__ == "__main__":
    key = jax.random.PRNGKey(0)
    B, num_inputs, L = 2, 8, 32
    num_channels = (16, 16)
    kernel_size = 2

    key, kx, kp = jax.random.split(key, 3)
    x = jax.random.normal(kx, (B, num_inputs, L), jnp.float32)
    blocks = init_params(kp, num_inputs, num_channels, kernel_size)

    ref = tcn_ref(x, blocks, kernel_size=kernel_size)

    # Default path: bf16 MXU operands, f32 accumulation/elementwise.
    out = tcn_pallas(x, blocks, kernel_size=kernel_size)
    out = jax.block_until_ready(out)
    assert out.shape == (B, num_channels[-1], L), out.shape
    assert jnp.allclose(out, ref, rtol=5e-2, atol=1e-2), float(
        jnp.max(jnp.abs(out - ref)))

    # f32 MXU path: bit-tight verification of the kernel structure.
    out32 = tcn_pallas(x, blocks, kernel_size=kernel_size,
                       mxu_dtype=jnp.float32)
    out32 = jax.block_until_ready(out32)
    assert jnp.allclose(out32, ref, atol=1e-5, rtol=1e-4), float(
        jnp.max(jnp.abs(out32 - ref)))

    print("KERNEL_OK")
</pallas_src>

<mosaic_0001>
module attributes {stable_mosaic.version = 11 : i64} {
  func.func @_tcn_fused_kernel(%arg0: i32, %arg1: memref<16x128xf32, #tpu.memory_space<vmem>>, %arg2: memref<80x1xf32, #tpu.memory_space<vmem>>, %arg3: memref<16x32xbf16, #tpu.memory_space<vmem>>, %arg4: memref<16x32xbf16, #tpu.memory_space<vmem>>, %arg5: memref<16x16xbf16, #tpu.memory_space<vmem>>, %arg6: memref<16x32xbf16, #tpu.memory_space<vmem>>, %arg7: memref<16x32xbf16, #tpu.memory_space<vmem>>, %arg8: memref<16x128xf32, #tpu.memory_space<vmem>>, %arg9: memref<32x128xbf16, #tpu.memory_space<vmem>>) attributes {dimension_semantics = [#tpu.dimension_semantics<parallel>], iteration_bounds = array<i64: 2>, scalar_prefetch = 0 : i64, scratch_operands = 1 : i64, tpu.core_type = #tpu.core_type<tc>, window_params = [{transform_indices = @transform_0, window_bounds = array<i64: 16, 128>}, {pipeline_mode = #tpu.pipeline_mode<synchronous>, transform_indices = @transform_1, window_bounds = array<i64: 80, 1>}, {pipeline_mode = #tpu.pipeline_mode<synchronous>, transform_indices = @transform_2, window_bounds = array<i64: 16, 32>}, {pipeline_mode = #tpu.pipeline_mode<synchronous>, transform_indices = @transform_3, window_bounds = array<i64: 16, 32>}, {pipeline_mode = #tpu.pipeline_mode<synchronous>, transform_indices = @transform_4, window_bounds = array<i64: 16, 16>}, {pipeline_mode = #tpu.pipeline_mode<synchronous>, transform_indices = @transform_5, window_bounds = array<i64: 16, 32>}, {pipeline_mode = #tpu.pipeline_mode<synchronous>, transform_indices = @transform_6, window_bounds = array<i64: 16, 32>}, {transform_indices = @transform_7, window_bounds = array<i64: 16, 128>}]} {
    %0 = tpu.iota {dimensions = array<i32: 1>} : vector<1x128xi32>
    %c1_i32 = arith.constant 1 : i32
    %1 = vector.broadcast %c1_i32 : i32 to vector<1x128xi32>
    %2 = arith.cmpi sge, %0, %1 : vector<1x128xi32>
    %c2_i32 = arith.constant 2 : i32
    %3 = vector.broadcast %c2_i32 : i32 to vector<1x128xi32>
    %4 = arith.cmpi sge, %0, %3 : vector<1x128xi32>
    %c0 = arith.constant 0 : index
    %c0_0 = arith.constant 0 : index
    %5 = vector.load %arg1[%c0, %c0_0] : memref<16x128xf32, #tpu.memory_space<vmem>>, vector<16x128xf32>
    %c1_i32_1 = arith.constant 1 : i32
    %6 = tpu.dynamic_rotate %5 by %c1_i32_1 dim 1 : vector<16x128xf32>, i32 -> vector<16x128xf32>
    %cst = arith.constant 0.000000e+00 : f32
    %7 = vector.shape_cast %2 : vector<1x128xi1> to vector<1x128xi1>
    %8 = vector.broadcast %7 : vector<1x128xi1> to vector<16x128xi1>
    %9 = vector.broadcast %cst : f32 to vector<16x128xf32>
    %10 = arith.select %8, %6, %9 : vector<16x128xi1>, vector<16x128xf32>
    %11 = arith.truncf %10 : vector<16x128xf32> to vector<16x128xbf16>
    %c0_2 = arith.constant 0 : index
    %c0_3 = arith.constant 0 : index
    %12 = vector.load %arg9[%c0_2, %c0_3] : memref<32x128xbf16, #tpu.memory_space<vmem>>, vector<16x128xbf16>
    tpu.vector_store %arg9[%c0_2, %c0_3], %11 {strides = array<i32>} : memref<32x128xbf16, #tpu.memory_space<vmem>>, vector<16x128xbf16>,
    %13 = arith.truncf %5 : vector<16x128xf32> to vector<16x128xbf16>
    %c16 = arith.constant 16 : index
    %c0_4 = arith.constant 0 : index
    %14 = vector.load %arg9[%c16, %c0_4] : memref<32x128xbf16, #tpu.memory_space<vmem>>, vector<16x128xbf16>
    tpu.vector_store %arg9[%c16, %c0_4], %13 {strides = array<i32>} : memref<32x128xbf16, #tpu.memory_space<vmem>>, vector<16x128xbf16>,
    %c0_5 = arith.constant 0 : index
    %c0_6 = arith.constant 0 : index
    %15 = vector.load %arg3[%c0_5, %c0_6] : memref<16x32xbf16, #tpu.memory_space<vmem>>, vector<16x32xbf16>
    %c0_7 = arith.constant 0 : index
    %c0_8 = arith.constant 0 : index
    %16 = vector.load %arg9[%c0_7, %c0_8] : memref<32x128xbf16, #tpu.memory_space<vmem>>, vector<32x128xbf16>
    %cst_9 = arith.constant dense<0.000000e+00> : vector<16x128xf32>
    %17 = tpu.matmul %15, %16, %cst_9 {dimension_numbers = #tpu.dot_dimension_numbers<[1], [0], [0], [1], [0, 0, 1, 1], [], []>} : vector<16x32xbf16>, vector<32x128xbf16>, vector<16x128xf32> -> vector<16x128xf32>
    %c0_10 = arith.constant 0 : index
    %c0_11 = arith.constant 0 : index
    %18 = vector.load %arg2[%c0_10, %c0_11] : memref<80x1xf32, #tpu.memory_space<vmem>>, vector<16x1xf32>
    %19 = vector.broadcast %18 : vector<16x1xf32> to vector<16x128xf32>
    %20 = arith.addf %17, %19 : vector<16x128xf32>
    %c0_12 = arith.constant 0 : index
    %c0_13 = arith.constant 0 : index
    %21 = vector.load %arg5[%c0_12, %c0_13] : memref<16x16xbf16, #tpu.memory_space<vmem>>, vector<16x16xbf16>
    %c16_14 = arith.constant 16 : index
    %c0_15 = arith.constant 0 : index
    %22 = vector.load %arg9[%c16_14, %c0_15] : memref<32x128xbf16, #tpu.memory_space<vmem>>, vector<16x128xbf16>
    %cst_16 = arith.constant dense<0.000000e+00> : vector<16x128xf32>
    %23 = tpu.matmul %21, %22, %cst_16 {dimension_numbers = #tpu.dot_dimension_numbers<[1], [0], [0], [1], [0, 0, 1, 1], [], []>} : vector<16x16xbf16>, vector<16x128xbf16>, vector<16x128xf32> -> vector<16x128xf32>
    %c32 = arith.constant 32 : index
    %c0_17 = arith.constant 0 : index
    %24 = vector.load %arg2[%c32, %c0_17] : memref<80x1xf32, #tpu.memory_space<vmem>>, vector<16x1xf32>
    %25 = vector.broadcast %24 : vector<16x1xf32> to vector<16x128xf32>
    %26 = arith.addf %23, %25 : vector<16x128xf32>
    %cst_18 = arith.constant 0.000000e+00 : f32
    %27 = vector.broadcast %cst_18 : f32 to vector<16x128xf32>
    %28 = arith.maximumf %20, %27 : vector<16x128xf32>
    %c1_i32_19 = arith.constant 1 : i32
    %29 = tpu.dynamic_rotate %28 by %c1_i32_19 dim 1 : vector<16x128xf32>, i32 -> vector<16x128xf32>
    %cst_20 = arith.constant 0.000000e+00 : f32
    %30 = vector.shape_cast %2 : vector<1x128xi1> to vector<1x128xi1>
    %31 = vector.broadcast %30 : vector<1x128xi1> to vector<16x128xi1>
    %32 = vector.broadcast %cst_20 : f32 to vector<16x128xf32>
    %33 = arith.select %31, %29, %32 : vector<16x128xi1>, vector<16x128xf32>
    %34 = arith.truncf %33 : vector<16x128xf32> to vector<16x128xbf16>
    %c0_21 = arith.constant 0 : index
    %c0_22 = arith.constant 0 : index
    %35 = vector.load %arg9[%c0_21, %c0_22] : memref<32x128xbf16, #tpu.memory_space<vmem>>, vector<16x128xbf16>
    tpu.vector_store %arg9[%c0_21, %c0_22], %34 {strides = array<i32>} : memref<32x128xbf16, #tpu.memory_space<vmem>>, vector<16x128xbf16>,
    %36 = arith.truncf %28 : vector<16x128xf32> to vector<16x128xbf16>
    %c16_23 = arith.constant 16 : index
    %c0_24 = arith.constant 0 : index
    %37 = vector.load %arg9[%c16_23, %c0_24] : memref<32x128xbf16, #tpu.memory_space<vmem>>, vector<16x128xbf16>
    tpu.vector_store %arg9[%c16_23, %c0_24], %36 {strides = array<i32>} : memref<32x128xbf16, #tpu.memory_space<vmem>>, vector<16x128xbf16>,
    %c0_25 = arith.constant 0 : index
    %c0_26 = arith.constant 0 : index
    %38 = vector.load %arg4[%c0_25, %c0_26] : memref<16x32xbf16, #tpu.memory_space<vmem>>, vector<16x32xbf16>
    %c0_27 = arith.constant 0 : index
    %c0_28 = arith.constant 0 : index
    %39 = vector.load %arg9[%c0_27, %c0_28] : memref<32x128xbf16, #tpu.memory_space<vmem>>, vector<32x128xbf16>
    %cst_29 = arith.constant dense<0.000000e+00> : vector<16x128xf32>
    %40 = tpu.matmul %38, %39, %cst_29 {dimension_numbers = #tpu.dot_dimension_numbers<[1], [0], [0], [1], [0, 0, 1, 1], [], []>} : vector<16x32xbf16>, vector<32x128xbf16>, vector<16x128xf32> -> vector<16x128xf32>
    %c16_30 = arith.constant 16 : index
    %c0_31 = arith.constant 0 : index
    %41 = vector.load %arg2[%c16_30, %c0_31] : memref<80x1xf32, #tpu.memory_space<vmem>>, vector<16x1xf32>
    %42 = vector.broadcast %41 : vector<16x1xf32> to vector<16x128xf32>
    %43 = arith.addf %40, %42 : vector<16x128xf32>
    %cst_32 = arith.constant 0.000000e+00 : f32
    %44 = vector.broadcast %cst_32 : f32 to vector<16x128xf32>
    %45 = arith.maximumf %43, %44 : vector<16x128xf32>
    %46 = arith.addf %45, %26 : vector<16x128xf32>
    %cst_33 = arith.constant 0.000000e+00 : f32
    %47 = vector.broadcast %cst_33 : f32 to vector<16x128xf32>
    %48 = arith.maximumf %46, %47 : vector<16x128xf32>
    %c2_i32_34 = arith.constant 2 : i32
    %49 = tpu.dynamic_rotate %48 by %c2_i32_34 dim 1 : vector<16x128xf32>, i32 -> vector<16x128xf32>
    %cst_35 = arith.constant 0.000000e+00 : f32
    %50 = vector.shape_cast %4 : vector<1x128xi1> to vector<1x128xi1>
    %51 = vector.broadcast %50 : vector<1x128xi1> to vector<16x128xi1>
    %52 = vector.broadcast %cst_35 : f32 to vector<16x128xf32>
    %53 = arith.select %51, %49, %52 : vector<16x128xi1>, vector<16x128xf32>
    %54 = arith.truncf %53 : vector<16x128xf32> to vector<16x128xbf16>
    %c0_36 = arith.constant 0 : index
    %c0_37 = arith.constant 0 : index
    %55 = vector.load %arg9[%c0_36, %c0_37] : memref<32x128xbf16, #tpu.memory_space<vmem>>, vector<16x128xbf16>
    tpu.vector_store %arg9[%c0_36, %c0_37], %54 {strides = array<i32>} : memref<32x128xbf16, #tpu.memory_space<vmem>>, vector<16x128xbf16>,
    %56 = arith.truncf %48 : vector<16x128xf32> to vector<16x128xbf16>
    %c16_38 = arith.constant 16 : index
    %c0_39 = arith.constant 0 : index
    %57 = vector.load %arg9[%c16_38, %c0_39] : memref<32x128xbf16, #tpu.memory_space<vmem>>, vector<16x128xbf16>
    tpu.vector_store %arg9[%c16_38, %c0_39], %56 {strides = array<i32>} : memref<32x128xbf16, #tpu.memory_space<vmem>>, vector<16x128xbf16>,
    %c0_40 = arith.constant 0 : index
    %c0_41 = arith.constant 0 : index
    %58 = vector.load %arg6[%c0_40, %c0_41] : memref<16x32xbf16, #tpu.memory_space<vmem>>, vector<16x32xbf16>
    %c0_42 = arith.constant 0 : index
    %c0_43 = arith.constant 0 : index
    %59 = vector.load %arg9[%c0_42, %c0_43] : memref<32x128xbf16, #tpu.memory_space<vmem>>, vector<32x128xbf16>
    %cst_44 = arith.constant dense<0.000000e+00> : vector<16x128xf32>
    %60 = tpu.matmul %58, %59, %cst_44 {dimension_numbers = #tpu.dot_dimension_numbers<[1], [0], [0], [1], [0, 0, 1, 1], [], []>} : vector<16x32xbf16>, vector<32x128xbf16>, vector<16x128xf32> -> vector<16x128xf32>
    %c48 = arith.constant 48 : index
    %c0_45 = arith.constant 0 : index
    %61 = vector.load %arg2[%c48, %c0_45] : memref<80x1xf32, #tpu.memory_space<vmem>>, vector<16x1xf32>
    %62 = vector.broadcast %61 : vector<16x1xf32> to vector<16x128xf32>
    %63 = arith.addf %60, %62 : vector<16x128xf32>
    %cst_46 = arith.constant 0.000000e+00 : f32
    %64 = vector.broadcast %cst_46 : f32 to vector<16x128xf32>
    %65 = arith.maximumf %63, %64 : vector<16x128xf32>
    %c2_i32_47 = arith.constant 2 : i32
    %66 = tpu.dynamic_rotate %65 by %c2_i32_47 dim 1 : vector<16x128xf32>, i32 -> vector<16x128xf32>
    %cst_48 = arith.constant 0.000000e+00 : f32
    %67 = vector.shape_cast %4 : vector<1x128xi1> to vector<1x128xi1>
    %68 = vector.broadcast %67 : vector<1x128xi1> to vector<16x128xi1>
    %69 = vector.broadcast %cst_48 : f32 to vector<16x128xf32>
    %70 = arith.select %68, %66, %69 : vector<16x128xi1>, vector<16x128xf32>
    %71 = arith.truncf %70 : vector<16x128xf32> to vector<16x128xbf16>
    %c0_49 = arith.constant 0 : index
    %c0_50 = arith.constant 0 : index
    %72 = vector.load %arg9[%c0_49, %c0_50] : memref<32x128xbf16, #tpu.memory_space<vmem>>, vector<16x128xbf16>
    tpu.vector_store %arg9[%c0_49, %c0_50], %71 {strides = array<i32>} : memref<32x128xbf16, #tpu.memory_space<vmem>>, vector<16x128xbf16>,
    %73 = arith.truncf %65 : vector<16x128xf32> to vector<16x128xbf16>
    %c16_51 = arith.constant 16 : index
    %c0_52 = arith.constant 0 : index
    %74 = vector.load %arg9[%c16_51, %c0_52] : memref<32x128xbf16, #tpu.memory_space<vmem>>, vector<16x128xbf16>
    tpu.vector_store %arg9[%c16_51, %c0_52], %73 {strides = array<i32>} : memref<32x128xbf16, #tpu.memory_space<vmem>>, vector<16x128xbf16>,
    %c0_53 = arith.constant 0 : index
    %c0_54 = arith.constant 0 : index
    %75 = vector.load %arg7[%c0_53, %c0_54] : memref<16x32xbf16, #tpu.memory_space<vmem>>, vector<16x32xbf16>
    %c0_55 = arith.constant 0 : index
    %c0_56 = arith.constant 0 : index
    %76 = vector.load %arg9[%c0_55, %c0_56] : memref<32x128xbf16, #tpu.memory_space<vmem>>, vector<32x128xbf16>
    %cst_57 = arith.constant dense<0.000000e+00> : vector<16x128xf32>
    %77 = tpu.matmul %75, %76, %cst_57 {dimension_numbers = #tpu.dot_dimension_numbers<[1], [0], [0], [1], [0, 0, 1, 1], [], []>} : vector<16x32xbf16>, vector<32x128xbf16>, vector<16x128xf32> -> vector<16x128xf32>
    %c64 = arith.constant 64 : index
    %c0_58 = arith.constant 0 : index
    %78 = vector.load %arg2[%c64, %c0_58] : memref<80x1xf32, #tpu.memory_space<vmem>>, vector<16x1xf32>
    %79 = vector.broadcast %78 : vector<16x1xf32> to vector<16x128xf32>
    %80 = arith.addf %77, %79 : vector<16x128xf32>
    %cst_59 = arith.constant 0.000000e+00 : f32
    %81 = vector.broadcast %cst_59 : f32 to vector<16x128xf32>
    %82 = arith.maximumf %80, %81 : vector<16x128xf32>
    %83 = arith.addf %82, %48 : vector<16x128xf32>
    %cst_60 = arith.constant 0.000000e+00 : f32
    %84 = vector.broadcast %cst_60 : f32 to vector<16x128xf32>
    %85 = arith.maximumf %83, %84 : vector<16x128xf32>
    %c0_61 = arith.constant 0 : index
    %c0_62 = arith.constant 0 : index
    %86 = vector.load %arg8[%c0_61, %c0_62] : memref<16x128xf32, #tpu.memory_space<vmem>>, vector<16x128xf32>
    tpu.vector_store %arg8[%c0_61, %c0_62], %85 {strides = array<i32>} : memref<16x128xf32, #tpu.memory_space<vmem>>, vector<16x128xf32>,
    return
  }
  func.func @transform_0(%arg0: i32) -> (i32, i32) {
    %c0_i32 = arith.constant 0 : i32
    %c0_i32_0 = arith.constant 0 : i32
    return %c0_i32, %arg0 : i32, i32
  }
  func.func @transform_1(%arg0: i32) -> (i32, i32) {
    %c0_i32 = arith.constant 0 : i32
    %c0_i32_0 = arith.constant 0 : i32
    %c0_i32_1 = arith.constant 0 : i32
    return %c0_i32, %c0_i32_0 : i32, i32
  }
  func.func @transform_2(%arg0: i32) -> (i32, i32) {
    %c0_i32 = arith.constant 0 : i32
    %c0_i32_0 = arith.constant 0 : i32
    %c0_i32_1 = arith.constant 0 : i32
    return %c0_i32, %c0_i32_0 : i32, i32
  }
  func.func @transform_3(%arg0: i32) -> (i32, i32) {
    %c0_i32 = arith.constant 0 : i32
    %c0_i32_0 = arith.constant 0 : i32
    %c0_i32_1 = arith.constant 0 : i32
    return %c0_i32, %c0_i32_0 : i32, i32
  }
  func.func @transform_4(%arg0: i32) -> (i32, i32) {
    %c0_i32 = arith.constant 0 : i32
    %c0_i32_0 = arith.constant 0 : i32
    %c0_i32_1 = arith.constant 0 : i32
    return %c0_i32, %c0_i32_0 : i32, i32
  }
  func.func @transform_5(%arg0: i32) -> (i32, i32) {
    %c0_i32 = arith.constant 0 : i32
    %c0_i32_0 = arith.constant 0 : i32
    %c0_i32_1 = arith.constant 0 : i32
    return %c0_i32, %c0_i32_0 : i32, i32
  }
  func.func @transform_6(%arg0: i32) -> (i32, i32) {
    %c0_i32 = arith.constant 0 : i32
    %c0_i32_0 = arith.constant 0 : i32
    %c0_i32_1 = arith.constant 0 : i32
    return %c0_i32, %c0_i32_0 : i32, i32
  }
  func.func @transform_7(%arg0: i32) -> (i32, i32) {
    %c0_i32 = arith.constant 0 : i32
    %c0_i32_0 = arith.constant 0 : i32
    return %c0_i32, %arg0 : i32, i32
  }
}

module attributes {stable_mosaic.version = 11 : i64} {
  func.func @_tcn_fused_kernel(%arg0: i32, %arg1: memref<16x128xf32, #tpu.memory_space<vmem>>, %arg2: memref<80x1xf32, #tpu.memory_space<vmem>>, %arg3: memref<16x32xbf16, #tpu.memory_space<vmem>>, %arg4: memref<16x32xbf16, #tpu.memory_space<vmem>>, %arg5: memref<16x16xbf16, #tpu.memory_space<vmem>>, %arg6: memref<16x32xbf16, #tpu.memory_space<vmem>>, %arg7: memref<16x32xbf16, #tpu.memory_space<vmem>>, %arg8: memref<16x128xf32, #tpu.memory_space<vmem>>, %arg9: memref<32x128xbf16, #tpu.memory_space<vmem>>) attributes {dimension_semantics = [#tpu.dimension_semantics<parallel>], iteration_bounds = array<i64: 2>, scalar_prefetch = 0 : i64, scratch_operands = 1 : i64, tpu.core_type = #tpu.core_type<tc>, window_params = [{transform_indices = @transform_0, window_bounds = array<i64: 16, 128>}, {pipeline_mode = #tpu.pipeline_mode<synchronous>, transform_indices = @transform_1, window_bounds = array<i64: 80, 1>}, {pipeline_mode = #tpu.pipeline_mode<synchronous>, transform_indices = @transform_2, window_bounds = array<i64: 16, 32>}, {pipeline_mode = #tpu.pipeline_mode<synchronous>, transform_indices = @transform_3, window_bounds = array<i64: 16, 32>}, {pipeline_mode = #tpu.pipeline_mode<synchronous>, transform_indices = @transform_4, window_bounds = array<i64: 16, 16>}, {pipeline_mode = #tpu.pipeline_mode<synchronous>, transform_indices = @transform_5, window_bounds = array<i64: 16, 32>}, {pipeline_mode = #tpu.pipeline_mode<synchronous>, transform_indices = @transform_6, window_bounds = array<i64: 16, 32>}, {transform_indices = @transform_7, window_bounds = array<i64: 16, 128>}]} {
    %0 = tpu.iota {dimensions = array<i32: 1>} : vector<1x128xi32>
    %c1_i32 = arith.constant 1 : i32
    %1 = vector.broadcast %c1_i32 : i32 to vector<1x128xi32>
    %2 = arith.cmpi sge, %0, %1 : vector<1x128xi32>
    %c2_i32 = arith.constant 2 : i32
    %3 = vector.broadcast %c2_i32 : i32 to vector<1x128xi32>
    %4 = arith.cmpi sge, %0, %3 : vector<1x128xi32>
    %c0 = arith.constant 0 : index
    %c0_0 = arith.constant 0 : index
    %5 = vector.load %arg1[%c0, %c0_0] : memref<16x128xf32, #tpu.memory_space<vmem>>, vector<16x128xf32>
    %c1_i32_1 = arith.constant 1 : i32
    %6 = tpu.dynamic_rotate %5 by %c1_i32_1 dim 1 : vector<16x128xf32>, i32 -> vector<16x128xf32>
    %cst = arith.constant 0.000000e+00 : f32
    %7 = vector.shape_cast %2 : vector<1x128xi1> to vector<1x128xi1>
    %8 = vector.broadcast %7 : vector<1x128xi1> to vector<16x128xi1>
    %9 = vector.broadcast %cst : f32 to vector<16x128xf32>
    %10 = arith.select %8, %6, %9 : vector<16x128xi1>, vector<16x128xf32>
    %11 = arith.truncf %10 : vector<16x128xf32> to vector<16x128xbf16>
    %c0_2 = arith.constant 0 : index
    %c0_3 = arith.constant 0 : index
    %12 = vector.load %arg9[%c0_2, %c0_3] : memref<32x128xbf16, #tpu.memory_space<vmem>>, vector<16x128xbf16>
    tpu.vector_store %arg9[%c0_2, %c0_3], %11 {strides = array<i32>} : memref<32x128xbf16, #tpu.memory_space<vmem>>, vector<16x128xbf16>,
    %13 = arith.truncf %5 : vector<16x128xf32> to vector<16x128xbf16>
    %c16 = arith.constant 16 : index
    %c0_4 = arith.constant 0 : index
    %14 = vector.load %arg9[%c16, %c0_4] : memref<32x128xbf16, #tpu.memory_space<vmem>>, vector<16x128xbf16>
    tpu.vector_store %arg9[%c16, %c0_4], %13 {strides = array<i32>} : memref<32x128xbf16, #tpu.memory_space<vmem>>, vector<16x128xbf16>,
    %c0_5 = arith.constant 0 : index
    %c0_6 = arith.constant 0 : index
    %15 = vector.load %arg3[%c0_5, %c0_6] : memref<16x32xbf16, #tpu.memory_space<vmem>>, vector<16x32xbf16>
    %c0_7 = arith.constant 0 : index
    %c0_8 = arith.constant 0 : index
    %16 = vector.load %arg9[%c0_7, %c0_8] : memref<32x128xbf16, #tpu.memory_space<vmem>>, vector<32x128xbf16>
    %cst_9 = arith.constant dense<0.000000e+00> : vector<16x128xf32>
    %17 = tpu.matmul %15, %16, %cst_9 {dimension_numbers = #tpu.dot_dimension_numbers<[1], [0], [0], [1], [0, 0, 1, 1], [], []>} : vector<16x32xbf16>, vector<32x128xbf16>, vector<16x128xf32> -> vector<16x128xf32>
    %c0_10 = arith.constant 0 : index
    %c0_11 = arith.constant 0 : index
    %18 = vector.load %arg2[%c0_10, %c0_11] : memref<80x1xf32, #tpu.memory_space<vmem>>, vector<16x1xf32>
    %19 = vector.broadcast %18 : vector<16x1xf32> to vector<16x128xf32>
    %20 = arith.addf %17, %19 : vector<16x128xf32>
    %c0_12 = arith.constant 0 : index
    %c0_13 = arith.constant 0 : index
    %21 = vector.load %arg5[%c0_12, %c0_13] : memref<16x16xbf16, #tpu.memory_space<vmem>>, vector<16x16xbf16>
    %c16_14 = arith.constant 16 : index
    %c0_15 = arith.constant 0 : index
    %22 = vector.load %arg9[%c16_14, %c0_15] : memref<32x128xbf16, #tpu.memory_space<vmem>>, vector<16x128xbf16>
    %cst_16 = arith.constant dense<0.000000e+00> : vector<16x128xf32>
    %23 = tpu.matmul %21, %22, %cst_16 {dimension_numbers = #tpu.dot_dimension_numbers<[1], [0], [0], [1], [0, 0, 1, 1], [], []>} : vector<16x16xbf16>, vector<16x128xbf16>, vector<16x128xf32> -> vector<16x128xf32>
    %c32 = arith.constant 32 : index
    %c0_17 = arith.constant 0 : index
    %24 = vector.load %arg2[%c32, %c0_17] : memref<80x1xf32, #tpu.memory_space<vmem>>, vector<16x1xf32>
    %25 = vector.broadcast %24 : vector<16x1xf32> to vector<16x128xf32>
    %26 = arith.addf %23, %25 : vector<16x128xf32>
    %cst_18 = arith.constant 0.000000e+00 : f32
    %27 = vector.broadcast %cst_18 : f32 to vector<16x128xf32>
    %28 = arith.maximumf %20, %27 : vector<16x128xf32>
    %c1_i32_19 = arith.constant 1 : i32
    %29 = tpu.dynamic_rotate %28 by %c1_i32_19 dim 1 : vector<16x128xf32>, i32 -> vector<16x128xf32>
    %cst_20 = arith.constant 0.000000e+00 : f32
    %30 = vector.shape_cast %2 : vector<1x128xi1> to vector<1x128xi1>
    %31 = vector.broadcast %30 : vector<1x128xi1> to vector<16x128xi1>
    %32 = vector.broadcast %cst_20 : f32 to vector<16x128xf32>
    %33 = arith.select %31, %29, %32 : vector<16x128xi1>, vector<16x128xf32>
    %34 = arith.truncf %33 : vector<16x128xf32> to vector<16x128xbf16>
    %c0_21 = arith.constant 0 : index
    %c0_22 = arith.constant 0 : index
    %35 = vector.load %arg9[%c0_21, %c0_22] : memref<32x128xbf16, #tpu.memory_space<vmem>>, vector<16x128xbf16>
    tpu.vector_store %arg9[%c0_21, %c0_22], %34 {strides = array<i32>} : memref<32x128xbf16, #tpu.memory_space<vmem>>, vector<16x128xbf16>,
    %36 = arith.truncf %28 : vector<16x128xf32> to vector<16x128xbf16>
    %c16_23 = arith.constant 16 : index
    %c0_24 = arith.constant 0 : index
    %37 = vector.load %arg9[%c16_23, %c0_24] : memref<32x128xbf16, #tpu.memory_space<vmem>>, vector<16x128xbf16>
    tpu.vector_store %arg9[%c16_23, %c0_24], %36 {strides = array<i32>} : memref<32x128xbf16, #tpu.memory_space<vmem>>, vector<16x128xbf16>,
    %c0_25 = arith.constant 0 : index
    %c0_26 = arith.constant 0 : index
    %38 = vector.load %arg4[%c0_25, %c0_26] : memref<16x32xbf16, #tpu.memory_space<vmem>>, vector<16x32xbf16>
    %c0_27 = arith.constant 0 : index
    %c0_28 = arith.constant 0 : index
    %39 = vector.load %arg9[%c0_27, %c0_28] : memref<32x128xbf16, #tpu.memory_space<vmem>>, vector<32x128xbf16>
    %cst_29 = arith.constant dense<0.000000e+00> : vector<16x128xf32>
    %40 = tpu.matmul %38, %39, %cst_29 {dimension_numbers = #tpu.dot_dimension_numbers<[1], [0], [0], [1], [0, 0, 1, 1], [], []>} : vector<16x32xbf16>, vector<32x128xbf16>, vector<16x128xf32> -> vector<16x128xf32>
    %c16_30 = arith.constant 16 : index
    %c0_31 = arith.constant 0 : index
    %41 = vector.load %arg2[%c16_30, %c0_31] : memref<80x1xf32, #tpu.memory_space<vmem>>, vector<16x1xf32>
    %42 = vector.broadcast %41 : vector<16x1xf32> to vector<16x128xf32>
    %43 = arith.addf %40, %42 : vector<16x128xf32>
    %cst_32 = arith.constant 0.000000e+00 : f32
    %44 = vector.broadcast %cst_32 : f32 to vector<16x128xf32>
    %45 = arith.maximumf %43, %44 : vector<16x128xf32>
    %46 = arith.addf %45, %26 : vector<16x128xf32>
    %cst_33 = arith.constant 0.000000e+00 : f32
    %47 = vector.broadcast %cst_33 : f32 to vector<16x128xf32>
    %48 = arith.maximumf %46, %47 : vector<16x128xf32>
    %c2_i32_34 = arith.constant 2 : i32
    %49 = tpu.dynamic_rotate %48 by %c2_i32_34 dim 1 : vector<16x128xf32>, i32 -> vector<16x128xf32>
    %cst_35 = arith.constant 0.000000e+00 : f32
    %50 = vector.shape_cast %4 : vector<1x128xi1> to vector<1x128xi1>
    %51 = vector.broadcast %50 : vector<1x128xi1> to vector<16x128xi1>
    %52 = vector.broadcast %cst_35 : f32 to vector<16x128xf32>
    %53 = arith.select %51, %49, %52 : vector<16x128xi1>, vector<16x128xf32>
    %54 = arith.truncf %53 : vector<16x128xf32> to vector<16x128xbf16>
    %c0_36 = arith.constant 0 : index
    %c0_37 = arith.constant 0 : index
    %55 = vector.load %arg9[%c0_36, %c0_37] : memref<32x128xbf16, #tpu.memory_space<vmem>>, vector<16x128xbf16>
    tpu.vector_store %arg9[%c0_36, %c0_37], %54 {strides = array<i32>} : memref<32x128xbf16, #tpu.memory_space<vmem>>, vector<16x128xbf16>,
    %56 = arith.truncf %48 : vector<16x128xf32> to vector<16x128xbf16>
    %c16_38 = arith.constant 16 : index
    %c0_39 = arith.constant 0 : index
    %57 = vector.load %arg9[%c16_38, %c0_39] : memref<32x128xbf16, #tpu.memory_space<vmem>>, vector<16x128xbf16>
    tpu.vector_store %arg9[%c16_38, %c0_39], %56 {strides = array<i32>} : memref<32x128xbf16, #tpu.memory_space<vmem>>, vector<16x128xbf16>,
    %c0_40 = arith.constant 0 : index
    %c0_41 = arith.constant 0 : index
    %58 = vector.load %arg6[%c0_40, %c0_41] : memref<16x32xbf16, #tpu.memory_space<vmem>>, vector<16x32xbf16>
    %c0_42 = arith.constant 0 : index
    %c0_43 = arith.constant 0 : index
    %59 = vector.load %arg9[%c0_42, %c0_43] : memref<32x128xbf16, #tpu.memory_space<vmem>>, vector<32x128xbf16>
    %cst_44 = arith.constant dense<0.000000e+00> : vector<16x128xf32>
    %60 = tpu.matmul %58, %59, %cst_44 {dimension_numbers = #tpu.dot_dimension_numbers<[1], [0], [0], [1], [0, 0, 1, 1], [], []>} : vector<16x32xbf16>, vector<32x128xbf16>, vector<16x128xf32> -> vector<16x128xf32>
    %c48 = arith.constant 48 : index
    %c0_45 = arith.constant 0 : index
    %61 = vector.load %arg2[%c48, %c0_45] : memref<80x1xf32, #tpu.memory_space<vmem>>, vector<16x1xf32>
    %62 = vector.broadcast %61 : vector<16x1xf32> to vector<16x128xf32>
    %63 = arith.addf %60, %62 : vector<16x128xf32>
    %cst_46 = arith.constant 0.000000e+00 : f32
    %64 = vector.broadcast %cst_46 : f32 to vector<16x128xf32>
    %65 = arith.maximumf %63, %64 : vector<16x128xf32>
    %c2_i32_47 = arith.constant 2 : i32
    %66 = tpu.dynamic_rotate %65 by %c2_i32_47 dim 1 : vector<16x128xf32>, i32 -> vector<16x128xf32>
    %cst_48 = arith.constant 0.000000e+00 : f32
    %67 = vector.shape_cast %4 : vector<1x128xi1> to vector<1x128xi1>
    %68 = vector.broadcast %67 : vector<1x128xi1> to vector<16x128xi1>
    %69 = vector.broadcast %cst_48 : f32 to vector<16x128xf32>
    %70 = arith.select %68, %66, %69 : vector<16x128xi1>, vector<16x128xf32>
    %71 = arith.truncf %70 : vector<16x128xf32> to vector<16x128xbf16>
    %c0_49 = arith.constant 0 : index
    %c0_50 = arith.constant 0 : index
    %72 = vector.load %arg9[%c0_49, %c0_50] : memref<32x128xbf16, #tpu.memory_space<vmem>>, vector<16x128xbf16>
    tpu.vector_store %arg9[%c0_49, %c0_50], %71 {strides = array<i32>} : memref<32x128xbf16, #tpu.memory_space<vmem>>, vector<16x128xbf16>,
    %73 = arith.truncf %65 : vector<16x128xf32> to vector<16x128xbf16>
    %c16_51 = arith.constant 16 : index
    %c0_52 = arith.constant 0 : index
    %74 = vector.load %arg9[%c16_51, %c0_52] : memref<32x128xbf16, #tpu.memory_space<vmem>>, vector<16x128xbf16>
    tpu.vector_store %arg9[%c16_51, %c0_52], %73 {strides = array<i32>} : memref<32x128xbf16, #tpu.memory_space<vmem>>, vector<16x128xbf16>,
    %c0_53 = arith.constant 0 : index
    %c0_54 = arith.constant 0 : index
    %75 = vector.load %arg7[%c0_53, %c0_54] : memref<16x32xbf16, #tpu.memory_space<vmem>>, vector<16x32xbf16>
    %c0_55 = arith.constant 0 : index
    %c0_56 = arith.constant 0 : index
    %76 = vector.load %arg9[%c0_55, %c0_56] : memref<32x128xbf16, #tpu.memory_space<vmem>>, vector<32x128xbf16>
    %cst_57 = arith.constant dense<0.000000e+00> : vector<16x128xf32>
    %77 = tpu.matmul %75, %76, %cst_57 {dimension_numbers = #tpu.dot_dimension_numbers<[1], [0], [0], [1], [0, 0, 1, 1], [], []>} : vector<16x32xbf16>, vector<32x128xbf16>, vector<16x128xf32> -> vector<16x128xf32>
    %c64 = arith.constant 64 : index
    %c0_58 = arith.constant 0 : index
    %78 = vector.load %arg2[%c64, %c0_58] : memref<80x1xf32, #tpu.memory_space<vmem>>, vector<16x1xf32>
    %79 = vector.broadcast %78 : vector<16x1xf32> to vector<16x128xf32>
    %80 = arith.addf %77, %79 : vector<16x128xf32>
    %cst_59 = arith.constant 0.000000e+00 : f32
    %81 = vector.broadcast %cst_59 : f32 to vector<16x128xf32>
    %82 = arith.maximumf %80, %81 : vector<16x128xf32>
    %83 = arith.addf %82, %48 : vector<16x128xf32>
    %cst_60 = arith.constant 0.000000e+00 : f32
    %84 = vector.broadcast %cst_60 : f32 to vector<16x128xf32>
    %85 = arith.maximumf %83, %84 : vector<16x128xf32>
    %c0_61 = arith.constant 0 : index
    %c0_62 = arith.constant 0 : index
    %86 = vector.load %arg8[%c0_61, %c0_62] : memref<16x128xf32, #tpu.memory_space<vmem>>, vector<16x128xf32>
    tpu.vector_store %arg8[%c0_61, %c0_62], %85 {strides = array<i32>} : memref<16x128xf32, #tpu.memory_space<vmem>>, vector<16x128xf32>,
    return
  }
  func.func @transform_0(%arg0: i32) -> (i32, i32) {
    %c0_i32 = arith.constant 0 : i32
    %c0_i32_0 = arith.constant 0 : i32
    return %c0_i32, %arg0 : i32, i32
  }
  func.func @transform_1(%arg0: i32) -> (i32, i32) {
    %c0_i32 = arith.constant 0 : i32
    %c0_i32_0 = arith.constant 0 : i32
    %c0_i32_1 = arith.constant 0 : i32
    return %c0_i32, %c0_i32_0 : i32, i32
  }
  func.func @transform_2(%arg0: i32) -> (i32, i32) {
    %c0_i32 = arith.constant 0 : i32
    %c0_i32_0 = arith.constant 0 : i32
    %c0_i32_1 = arith.constant 0 : i32
    return %c0_i32, %c0_i32_0 : i32, i32
  }
  func.func @transform_3(%arg0: i32) -> (i32, i32) {
    %c0_i32 = arith.constant 0 : i32
    %c0_i32_0 = arith.constant 0 : i32
    %c0_i32_1 = arith.constant 0 : i32
    return %c0_i32, %c0_i32_0 : i32, i32
  }
  func.func @transform_4(%arg0: i32) -> (i32, i32) {
    %c0_i32 = arith.constant 0 : i32
    %c0_i32_0 = arith.constant 0 : i32
    %c0_i32_1 = arith.constant 0 : i32
    return %c0_i32, %c0_i32_0 : i32, i32
  }
  func.func @transform_5(%arg0: i32) -> (i32, i32) {
    %c0_i32 = arith.constant 0 : i32
    %c0_i32_0 = arith.constant 0 : i32
    %c0_i32_1 = arith.constant 0 : i32
    return %c0_i32, %c0_i32_0 : i32, i32
  }
  func.func @transform_6(%arg0: i32) -> (i32, i32) {
    %c0_i32 = arith.constant 0 : i32
    %c0_i32_0 = arith.constant 0 : i32
    %c0_i32_1 = arith.constant 0 : i32
    return %c0_i32, %c0_i32_0 : i32, i32
  }
  func.func @transform_7(%arg0: i32) -> (i32, i32) {
    %c0_i32 = arith.constant 0 : i32
    %c0_i32_0 = arith.constant 0 : i32
    return %c0_i32, %arg0 : i32, i32
  }
}

</mosaic_0001>

<llo_original>
// kernel: tpu_custom_call.1
$region0: #{tpu_custom_call.1}
  #allocation0 [shape = 'u32[]', space=smem, size = 0x4, offset = 0x4, fixed_abs, tag = 'smem constant byte address 0x4 - core index']
  #allocation1 [shape = 'u32[144,128]{1,0:T(1,128)}', space=vmem, size = 0x12000, scoped, tag = 'internal scratch']
  #allocation2 [shape = 'bf16[32,128]{1,0:T(16,128)(2,1)}', space=vmem, size = 0x2000, scoped, tag = 'scratch operand']
  %s0 = inlined_call_operand.vmem [shape: f32[16,256], index: 0, kind: input, shape index: {}]
  %s1 = inlined_call_operand.vmem [shape: f32[80,1], index: 1, kind: input, shape index: {}]
  %s2 = inlined_call_operand.vmem [shape: bf16[16,32], index: 2, kind: input, shape index: {}]
  %s3 = inlined_call_operand.vmem [shape: bf16[16,32], index: 3, kind: input, shape index: {}]
  %s4 = inlined_call_operand.vmem [shape: bf16[16,16], index: 4, kind: input, shape index: {}]
  %s5 = inlined_call_operand.vmem [shape: bf16[16,32], index: 5, kind: input, shape index: {}]
  %s6 = inlined_call_operand.vmem [shape: bf16[16,32], index: 6, kind: input, shape index: {}]
  %s7 = inlined_call_operand.hbm [shape: f32[16,256], index: 7, kind: output, shape index: {}]
  %s8 = sld [smem:[#allocation0]]
  $region99: #{tpu_custom_call.1} parent=0
    _
  %s10 = ssub.s32 1, %s8
  %s11 = scalar_select 0, %s10, %s8
  $region1: #{tpu_custom_call.1} parent=0
    #allocation3 [shape = 'u8[16384]{0}', space=vmem, size = 0x4000, scoped, tag = 'input window, operand 0']
    #allocation4 [shape = 'u8[16384]{0}', space=vmem, size = 0x4000, scoped, tag = 'output window, operand 0']
    #allocation5 [shape = 's32[2]{0}', space=sflag, size = 0x8, scoped, tag = 'scoped memory for tpu_custom_call.1']
    %12 = vsyncpa [#allocation5], 0
    %s13 = scalar_lea.sflag [#allocation5], 1
    %14 = vsyncpa %s13, 0
    loop: start=0, step=1, limit=4
    $region2: #{tpu_custom_call.1} parent=1 // loop_pre_header
      _
    $region3: #{tpu_custom_call.1} parent=1 // loop_header
      %s16 = sphi 0, %s20
      %p17 = scmp.ge.s32.totalorder %s16, 4
      %s26 = sphi 0, %s28
      %s29 = sphi 0, %s26
      %s30 = sphi 0, %s29
      %s46 = sphi 0, %s30
      %s50 = sphi 0, %s50
      %s52 = sphi 0, %s50
      %s53 = sphi 0, %s52
      %s67 = sphi 0, %s53
      %s71 = sphi 0, %s71
      %s73 = sphi 0, %s71
      %s74 = sphi 0, %s73
      %s88 = sphi 0, %s74
      %s92 = sphi 0, %s92
      %s94 = sphi 0, %s92
      %s95 = sphi 0, %s94
      %s109 = sphi 0, %s95
      %s113 = sphi 0, %s113
      %s115 = sphi 0, %s113
      %s116 = sphi 0, %s115
      %s130 = sphi 0, %s116
      %s134 = sphi 0, %s134
      %s136 = sphi 0, %s134
      %s137 = sphi 0, %s136
      %s151 = sphi 0, %s137
      %s155 = sphi 0, %s155
      %s157 = sphi 0, %s155
      %s158 = sphi 0, %s157
      %s172 = sphi 0, %s158
      %s178 = sphi 0, %s180
      %s181 = sphi 0, %s178
      %s182 = sphi 0, %s181
      %s198 = sphi 0, %s182
    $region4: #{tpu_custom_call.1} parent=1 // loop_header_branch
      %19 = sbr.rel (%p17) target = $region8
    $region5: #{tpu_custom_call.1} parent=1 // loop_body
      %s21 = ssub.s32 %s16, 1
      %s22 = ssub.s32 %s16, 2
      %s23 = sadd.s32 %s16, 1
      %s24 = ssub.s32 %s16, %s23
      %p25 = scmp.eq.s32.totalorder %s24, 0
      %s27 = sadd.s32 %s26, 1
      %s28 = scalar_select %p25, %s26, %s27
      %p31 = pneg %p25
      %p32 = scmp.eq.s32.totalorder %s16, 1
      %p33 = por %p31, %p32
      %p34 = scmp.ne.s32.totalorder %s26, %s29
      %p35 = scmp.eq.s32.totalorder %s16, 0
      %p36 = por %p34, %p35
      %p37 = scmp.ne.s32.totalorder %s26, %s29
      %p38 = scmp.eq.s32.totalorder %s21, 1
      %p39 = por %p37, %p38
      %p40 = scmp.ne.s32.totalorder %s29, %s30
      %p41 = scmp.eq.s32.totalorder %s21, 0
      %p42 = por %p40, %p41
      %p43 = scmp.ne.s32.totalorder %s29, %s30
      %p44 = scmp.eq.s32.totalorder %s22, 1
      %p45 = por %p43, %p44
      %p47 = scmp.ne.s32.totalorder %s30, %s46
      %p48 = scmp.eq.s32.totalorder %s22, 0
      %p49 = por %p47, %p48
      %s51 = sadd.s32 %s50, 1
      %p54 = scmp.eq.s32.totalorder %s16, 1
      %p55 = scmp.ne.s32.totalorder %s50, %s52
      %p56 = scmp.eq.s32.totalorder %s16, 0
      %p57 = por %p55, %p56
      %p58 = scmp.ne.s32.totalorder %s50, %s52
      %p59 = scmp.eq.s32.totalorder %s21, 1
      %p60 = por %p58, %p59
      %p61 = scmp.ne.s32.totalorder %s52, %s53
      %p62 = scmp.eq.s32.totalorder %s21, 0
      %p63 = por %p61, %p62
      %p64 = scmp.ne.s32.totalorder %s52, %s53
      %p65 = scmp.eq.s32.totalorder %s22, 1
      %p66 = por %p64, %p65
      %p68 = scmp.ne.s32.totalorder %s53, %s67
      %p69 = scmp.eq.s32.totalorder %s22, 0
      %p70 = por %p68, %p69
      %s72 = sadd.s32 %s71, 1
      %p75 = scmp.eq.s32.totalorder %s16, 1
      %p76 = scmp.ne.s32.totalorder %s71, %s73
      %p77 = scmp.eq.s32.totalorder %s16, 0
      %p78 = por %p76, %p77
      %p79 = scmp.ne.s32.totalorder %s71, %s73
      %p80 = scmp.eq.s32.totalorder %s21, 1
      %p81 = por %p79, %p80
      %p82 = scmp.ne.s32.totalorder %s73, %s74
      %p83 = scmp.eq.s32.totalorder %s21, 0
      %p84 = por %p82, %p83
      %p85 = scmp.ne.s32.totalorder %s73, %s74
      %p86 = scmp.eq.s32.totalorder %s22, 1
      %p87 = por %p85, %p86
      %p89 = scmp.ne.s32.totalorder %s74, %s88
      %p90 = scmp.eq.s32.totalorder %s22, 0
      %p91 = por %p89, %p90
      %s93 = sadd.s32 %s92, 1
      %p96 = scmp.eq.s32.totalorder %s16, 1
      %p97 = scmp.ne.s32.totalorder %s92, %s94
      %p98 = scmp.eq.s32.totalorder %s16, 0
      %p99 = por %p97, %p98
      %p100 = scmp.ne.s32.totalorder %s92, %s94
      %p101 = scmp.eq.s32.totalorder %s21, 1
      %p102 = por %p100, %p101
      %p103 = scmp.ne.s32.totalorder %s94, %s95
      %p104 = scmp.eq.s32.totalorder %s21, 0
      %p105 = por %p103, %p104
      %p106 = scmp.ne.s32.totalorder %s94, %s95
      %p107 = scmp.eq.s32.totalorder %s22, 1
      %p108 = por %p106, %p107
      %p110 = scmp.ne.s32.totalorder %s95, %s109
      %p111 = scmp.eq.s32.totalorder %s22, 0
      %p112 = por %p110, %p111
      %s114 = sadd.s32 %s113, 1
      %p117 = scmp.eq.s32.totalorder %s16, 1
      %p118 = scmp.ne.s32.totalorder %s113, %s115
      %p119 = scmp.eq.s32.totalorder %s16, 0
      %p120 = por %p118, %p119
      %p121 = scmp.ne.s32.totalorder %s113, %s115
      %p122 = scmp.eq.s32.totalorder %s21, 1
      %p123 = por %p121, %p122
      %p124 = scmp.ne.s32.totalorder %s115, %s116
      %p125 = scmp.eq.s32.totalorder %s21, 0
      %p126 = por %p124, %p125
      %p127 = scmp.ne.s32.totalorder %s115, %s116
      %p128 = scmp.eq.s32.totalorder %s22, 1
      %p129 = por %p127, %p128
      %p131 = scmp.ne.s32.totalorder %s116, %s130
      %p132 = scmp.eq.s32.totalorder %s22, 0
      %p133 = por %p131, %p132
      %s135 = sadd.s32 %s134, 1
      %p138 = scmp.eq.s32.totalorder %s16, 1
      %p139 = scmp.ne.s32.totalorder %s134, %s136
      %p140 = scmp.eq.s32.totalorder %s16, 0
      %p141 = por %p139, %p140
      %p142 = scmp.ne.s32.totalorder %s134, %s136
      %p143 = scmp.eq.s32.totalorder %s21, 1
      %p144 = por %p142, %p143
      %p145 = scmp.ne.s32.totalorder %s136, %s137
      %p146 = scmp.eq.s32.totalorder %s21, 0
      %p147 = por %p145, %p146
      %p148 = scmp.ne.s32.totalorder %s136, %s137
      %p149 = scmp.eq.s32.totalorder %s22, 1
      %p150 = por %p148, %p149
      %p152 = scmp.ne.s32.totalorder %s137, %s151
      %p153 = scmp.eq.s32.totalorder %s22, 0
      %p154 = por %p152, %p153
      %s156 = sadd.s32 %s155, 1
      %p159 = scmp.eq.s32.totalorder %s16, 1
      %p160 = scmp.ne.s32.totalorder %s155, %s157
      %p161 = scmp.eq.s32.totalorder %s16, 0
      %p162 = por %p160, %p161
      %p163 = scmp.ne.s32.totalorder %s155, %s157
      %p164 = scmp.eq.s32.totalorder %s21, 1
      %p165 = por %p163, %p164
      %p166 = scmp.ne.s32.totalorder %s157, %s158
      %p167 = scmp.eq.s32.totalorder %s21, 0
      %p168 = por %p166, %p167
      %p169 = scmp.ne.s32.totalorder %s157, %s158
      %p170 = scmp.eq.s32.totalorder %s22, 1
      %p171 = por %p169, %p170
      %p173 = scmp.ne.s32.totalorder %s158, %s172
      %p174 = scmp.eq.s32.totalorder %s22, 0
      %p175 = por %p173, %p174
      %s176 = ssub.s32 %s16, %s23
      %p177 = scmp.eq.s32.totalorder %s176, 0
      %s179 = sadd.s32 %s178, 1
      %s180 = scalar_select %p177, %s178, %s179
      %p183 = pneg %p177
      %p184 = scmp.eq.s32.totalorder %s16, 1
      %p185 = por %p183, %p184
      %p186 = scmp.ne.s32.totalorder %s178, %s181
      %p187 = scmp.eq.s32.totalorder %s16, 0
      %p188 = por %p186, %p187
      %p189 = scmp.ne.s32.totalorder %s178, %s181
      %p190 = scmp.eq.s32.totalorder %s21, 1
      %p191 = por %p189, %p190
      %p192 = scmp.ne.s32.totalorder %s181, %s182
      %p193 = scmp.eq.s32.totalorder %s21, 0
      %p194 = por %p192, %p193
      %p195 = scmp.ne.s32.totalorder %s181, %s182
      %p196 = scmp.eq.s32.totalorder %s22, 1
      %p197 = por %p195, %p196
      %p199 = scmp.ne.s32.totalorder %s182, %s198
      %p200 = scmp.eq.s32.totalorder %s22, 0
      %p201 = por %p199, %p200
      %p202 = scmp.le.s32.totalorder 1, %s16
      %p203 = scmp.lt.s32.totalorder %s16, 3
      %p204 = pnand %p202, %p203
      %p205 = pneg %p204
      // Predicated region
      $region9: #{tpu_custom_call.1} parent=5 // pred_check
        _
      $region10: #{tpu_custom_call.1} parent=5 // pred_check_branch
        %207 = sbr.rel (%p204) target = $region12
      $region11: #{tpu_custom_call.1} parent=5 // pred_region
        %s208 = ssub.s32 %s16, 1
        // Predicated region
        $region13: #{tpu_custom_call.1} parent=11 // pred_check
          %p209 = pneg %p63
        $region14: #{tpu_custom_call.1} parent=11 // pred_check_branch
          %211 = sbr.rel (%p209) target = $region16
        $region15: #{tpu_custom_call.1} parent=11 // pred_region
          _
        $region16: #{tpu_custom_call.1} parent=11 // pred_fallthru
          _
        // Predicated region
        $region17: #{tpu_custom_call.1} parent=11 // pred_check
          %p212 = pneg %p84
        $region18: #{tpu_custom_call.1} parent=11 // pred_check_branch
          %214 = sbr.rel (%p212) target = $region20
        $region19: #{tpu_custom_call.1} parent=11 // pred_region
          _
        $region20: #{tpu_custom_call.1} parent=11 // pred_fallthru
          _
        // Predicated region
        $region21: #{tpu_custom_call.1} parent=11 // pred_check
          %p215 = pneg %p105
        $region22: #{tpu_custom_call.1} parent=11 // pred_check_branch
          %217 = sbr.rel (%p215) target = $region24
        $region23: #{tpu_custom_call.1} parent=11 // pred_region
          _
        $region24: #{tpu_custom_call.1} parent=11 // pred_fallthru
          _
        // Predicated region
        $region25: #{tpu_custom_call.1} parent=11 // pred_check
          %p218 = pneg %p126
        $region26: #{tpu_custom_call.1} parent=11 // pred_check_branch
          %220 = sbr.rel (%p218) target = $region28
        $region27: #{tpu_custom_call.1} parent=11 // pred_region
          _
        $region28: #{tpu_custom_call.1} parent=11 // pred_fallthru
          _
        // Predicated region
        $region29: #{tpu_custom_call.1} parent=11 // pred_check
          %p221 = pneg %p147
        $region30: #{tpu_custom_call.1} parent=11 // pred_check_branch
          %223 = sbr.rel (%p221) target = $region32
        $region31: #{tpu_custom_call.1} parent=11 // pred_region
          _
        $region32: #{tpu_custom_call.1} parent=11 // pred_fallthru
          _
        // Predicated region
        $region33: #{tpu_custom_call.1} parent=11 // pred_check
          %p224 = pneg %p168
        $region34: #{tpu_custom_call.1} parent=11 // pred_check_branch
          %226 = sbr.rel (%p224) target = $region36
        $region35: #{tpu_custom_call.1} parent=11 // pred_region
          _
        $region36: #{tpu_custom_call.1} parent=11 // pred_fallthru
          _
      $region12: #{tpu_custom_call.1} parent=5 // pred_fallthru
        _
      %p227 = scmp.lt.s32.totalorder %s16, 2
      // Predicated region
      $region37: #{tpu_custom_call.1} parent=5 // pred_check
        %p228 = pneg %p227
      $region38: #{tpu_custom_call.1} parent=5 // pred_check_branch
        %230 = sbr.rel (%p228) target = $region40
      $region39: #{tpu_custom_call.1} parent=5 // pred_region
        // Predicated region
        $region41: #{tpu_custom_call.1} parent=39 // pred_check
          %p231 = pneg %p36
        $region42: #{tpu_custom_call.1} parent=39 // pred_check_branch
          %233 = sbr.rel (%p231) target = $region44
        $region43: #{tpu_custom_call.1} parent=39 // pred_region
          %s234 = sand.u32 %s26, 1
          %s235 = sand.u32 %s26, 1
          %s236 = smul.addr %s235, 16
          %s237 = scalar_lea.vmem [#allocation3], %s236
          %s238 = smul.addr %s16, 8
          %s239 = scalar_lea.vmem %s0, %s238
          // Predicated region
          $region45: #{tpu_custom_call.1} parent=43 // pred_check
            _
          $region46: #{tpu_custom_call.1} parent=43 // pred_check_branch
            %241 = sbr.rel (0) target = $region48
          $region47: #{tpu_custom_call.1} parent=43 // pred_region
            // Predicated region
            $region49: #{tpu_custom_call.1} parent=47 // pred_check
              _
            $region50: #{tpu_custom_call.1} parent=47 // pred_check_branch
              %243 = sbr.rel (0) target = $region52
            $region51: #{tpu_custom_call.1} parent=47 // pred_region
              // Predicated region
              $region64: #{tpu_custom_call.1} parent=51 // pred_check
                _
              $region65: #{tpu_custom_call.1} parent=51 // pred_check_branch
                %260 = sbr.rel (0) target = $region67
              $region66: #{tpu_custom_call.1} parent=51 // pred_region
                loop: start=0, step=1, limit=1
                $region68: #{tpu_custom_call.1} parent=66 // loop_pre_header
                  _
                $region69: #{tpu_custom_call.1} parent=66 // loop_header
                  %s262 = sphi 0, %s266
                  %p263 = scmp.ge.s32.totalorder %s262, 1
                  %s267 = sphi %s239, %s239
                  %s268 = sphi %s237, %s237
                $region70: #{tpu_custom_call.1} parent=66 // loop_header_branch
                  %265 = sbr.rel (%p263) target = $region74
                $region71: #{tpu_custom_call.1} parent=66 // loop_body
                  %v269 = vld [vmem:[%s267] sm:$0xff]
                  %270 = vst [vmem:[%s268] sm:$0xff] %v269
                  %v271 = vld [vmem:[%s267 + $0x10] sm:$0xff]
                  %272 = vst [vmem:[%s268 + $0x8] sm:$0xff] %v271
                $region72: #{tpu_custom_call.1} parent=66 // loop_footer
                  %s266 = sadd.s32 1, %s262
                $region73: #{tpu_custom_call.1} parent=66 // loop_footer_branch
                  %261 = sbr.rel target = $region69
                $region74: #{tpu_custom_call.1} parent=66 // loop_exit
                  _
              $region67: #{tpu_custom_call.1} parent=51 // pred_fallthru
                _
              // Predicated region
              $region75: #{tpu_custom_call.1} parent=51 // pred_check
                _
              $region76: #{tpu_custom_call.1} parent=51 // pred_check_branch
                %274 = sbr.rel target = $region78
              $region77: #{tpu_custom_call.1} parent=51 // pred_region
                _
              $region78: #{tpu_custom_call.1} parent=51 // pred_fallthru
                _
            $region52: #{tpu_custom_call.1} parent=47 // pred_fallthru
              _
            // Predicated region
            $region53: #{tpu_custom_call.1} parent=47 // pred_check
              _
            $region54: #{tpu_custom_call.1} parent=47 // pred_check_branch
              %245 = sbr.rel target = $region56
            $region55: #{tpu_custom_call.1} parent=47 // pred_region
              loop: start=0, step=1, limit=1
              $region57: #{tpu_custom_call.1} parent=55 // loop_pre_header
                _
              $region58: #{tpu_custom_call.1} parent=55 // loop_header
                %s248 = sphi 0, %s252
                %p249 = scmp.ge.s32.totalorder %s248, 1
                %s253 = sphi %s239, %s239
                %s254 = sphi %s237, %s237
              $region59: #{tpu_custom_call.1} parent=55 // loop_header_branch
                %251 = sbr.rel (%p249) target = $region63
              $region60: #{tpu_custom_call.1} parent=55 // loop_body
                %v255 = vld [vmem:[%s253] sm:$0xff]
                %256 = vst [vmem:[%s254] sm:$0xff] %v255
                %v257 = vld [vmem:[%s253 + $0x10] sm:$0xff]
                %258 = vst [vmem:[%s254 + $0x8] sm:$0xff] %v257
              $region61: #{tpu_custom_call.1} parent=55 // loop_footer
                %s252 = sadd.s32 1, %s248
              $region62: #{tpu_custom_call.1} parent=55 // loop_footer_branch
                %247 = sbr.rel target = $region58
              $region63: #{tpu_custom_call.1} parent=55 // loop_exit
                _
            $region56: #{tpu_custom_call.1} parent=47 // pred_fallthru
              _
          $region48: #{tpu_custom_call.1} parent=43 // pred_fallthru
            _
          %275 = vnop
        $region44: #{tpu_custom_call.1} parent=39 // pred_fallthru
          _
      $region40: #{tpu_custom_call.1} parent=5 // pred_fallthru
        _
      %p276 = scmp.le.s32.totalorder 1, %s16
      %p277 = scmp.lt.s32.totalorder %s16, 3
      %p278 = pnand %p276, %p277
      %p279 = pneg %p278
      // Predicated region
      $region79: #{tpu_custom_call.1} parent=5 // pred_check
        _
      $region80: #{tpu_custom_call.1} parent=5 // pred_check_branch
        %281 = sbr.rel (%p278) target = $region82
      $region81: #{tpu_custom_call.1} parent=5 // pred_region
        %s282 = ssub.s32 %s16, 1
        %s283 = sand.u32 %s29, 1
        %s284 = sand.u32 %s29, 1
        %s285 = smul.addr %s284, 16
        %s286 = scalar_lea.vmem [#allocation3], %s285
        // Predicated region
        $region83: #{tpu_custom_call.1} parent=81 // pred_check
          %p287 = pneg %p42
        $region84: #{tpu_custom_call.1} parent=81 // pred_check_branch
          %289 = sbr.rel (%p287) target = $region86
        $region85: #{tpu_custom_call.1} parent=81 // pred_region
          _
        $region86: #{tpu_custom_call.1} parent=81 // pred_fallthru
          _
        %s290 = sand.u32 %s29, 1
        %s291 = sand.u32 %s29, 1
        %s292 = smul.addr %s291, 16
        %s293 = scalar_lea.vmem [#allocation3], %s292
        %p294 = pneg %p42
        %p295 = pneg %p39
        %p296 = pneg %p63
        %p297 = pneg %p60
        %p298 = pneg %p84
        %p299 = pneg %p81
        %p300 = pneg %p105
        %p301 = pneg %p102
        %p302 = pneg %p126
        %p303 = pneg %p123
        %p304 = pneg %p147
        %p305 = pneg %p144
        %p306 = pneg %p168
        %p307 = pneg %p165
        %p308 = pneg %p194
        %p309 = pneg %p191
        %s310 = sand.u32 %s181, 1
        %s311 = scalar_lea.sflag [#allocation5], %s310
        %s312 = sand.u32 %s181, 1
        %s313 = smul.addr %s312, 16
        %s314 = scalar_lea.vmem [#allocation4], %s313
        %v316 = vlaneseq
        %v317 = vand.u32 %v316, 127
        %vm318 = vcmp.ge.s32.totalorder %v317, 1
        %vm319 = vcmp.ge.s32.totalorder %v317, 2
        %v320 = vld [vmem:[%s286] sm:$0xff]
        %v321 = vld [vmem:[%s286 + $0x8] sm:$0xff]
        %322 = vrot.lane.b32.xlu0 %v320, 1
        %v323 = vpop.permute.xlu0 %322
        %324 = vrot.lane.b32.xlu0 %v321, 1
        %v325 = vpop.permute.xlu0 %324
        %v326 = vsel %vm318, 1, 0
        %vm327 = vcmp.eq.s32.totalorder %v326, 1
        %v328 = vsel %vm327, %v323, 0.0
        %v329 = vsel %vm327, %v325, 0.0
        %v330 = vpack.c.bf16 %v329, %v328
        %331 = vst [vmem:[#allocation2] sm:$0xff] %v330
        %v332 = vpack.c.bf16 %v321, %v320
        %333 = vst [vmem:[#allocation2 + $0x8] sm:$0xff] %v332
        %v334 = vld [vmem:[%s2] sm:$0xf]
        %v335 = vld [vmem:[%s2 + $0x4] sm:$0xf]
        %v336 = vld [vmem:[#allocation2] sm:$0xff]
        %v337 = vld [vmem:[#allocation2 + $0x8] sm:$0xff]
        %v338 = vld [vmem:[%s1] sm:$0xff]
        %v339 = vld [vmem:[%s1 + $0x8] sm:$0xff]
        %341 = vset.pattern.permute.xlu0 0
        %342 = vperm.xlu0 %341, %v338
        %v343 = vpop.permute.xlu0 %342
        %346 = vset.pattern.permute.xlu0 0
        %347 = vperm.xlu0 %346, %v339
        %v348 = vpop.permute.xlu0 %347
        %v352 = vunpack.c.l.b16 %v334
        %v353 = vunpack.c.l.b16 %v335
        %v354 = vpack.c.b16 %v353, %v352
        %vm355 = vcmask 261120
        %v357 = vsel %vm355, %v354, 0
        %359 = vmatprep.subr.bf16.mxu0 0
        %360 = vmatpush1.bf16.msra.mxu0 %v336
        %361 = vmatprep.subr.bf16.mxu0 0
        %362 = vmatpush1.bf16.msra.mxu0 %v337
        %363 = vmatprep.subr.bf16.mxu0 0
        %364 = vmatpush1.bf16.msra.mxu0 0
        %365 = vmatprep.subr.bf16.mxu0 0
        %366 = vmatpush1.bf16.msra.mxu0 0
        %367 = vmatprep.subr.bf16.mxu0 0
        %368 = vmatpush1.bf16.msra.mxu0 0
        %369 = vmatprep.subr.bf16.mxu0 0
        %370 = vmatpush1.bf16.msra.mxu0 0
        %371 = vmatprep.subr.bf16.mxu0 0
        %372 = vmatpush1.bf16.msra.mxu0 0
        %373 = vmatprep.subr.bf16.mxu0 0
        %374 = vmatpush1.bf16.msra.mxu0 0
        %375 = vmatprep.subr.bf16.mxu0 0
        %376 = vmatpush1.bf16.msra.mxu0 0
        %377 = vmatprep.subr.bf16.mxu0 0
        %378 = vmatpush1.bf16.msra.mxu0 0
        %379 = vmatprep.subr.bf16.mxu0 0
        %380 = vmatpush1.bf16.msra.mxu0 0
        %381 = vmatprep.subr.bf16.mxu0 0
        %382 = vmatpush1.bf16.msra.mxu0 0
        %383 = vmatprep.subr.bf16.mxu0 0
        %384 = vmatpush1.bf16.msra.mxu0 0
        %385 = vmatprep.subr.bf16.mxu0 0
        %386 = vmatpush1.bf16.msra.mxu0 0
        %387 = vmatprep.subr.bf16.mxu0 0
        %388 = vmatpush1.bf16.msra.mxu0 0
        %389 = vmatprep.subr.bf16.mxu0 0
        %390 = vmatpush1.bf16.msra.mxu0 0
        %391 = vmatprep.mubr.bf16.mxu0 0
        %392 = vmatmul.mubr.bf16.gmra.mrb[0].mxu0 %v357
        %v393 = vpop.f32.mrb[0].mxu0
        %v394 = vadd.f32 %v343, %v393
        %v395 = vpop.f32.mrb[0].mxu0
        %v396 = vpop.f32.mrb[0].mxu0
        %v397 = vadd.f32 %v348, %v396
        %v398 = vpop.f32.mrb[0].mxu0
        %399 = vdwg.mxu0
        %v400 = vld [vmem:[%s4] sm:$0xf]
        %v401 = vld [vmem:[%s4 + $0x4] sm:$0xf]
        %v402 = vld [vmem:[%s1 + $0x20] sm:$0xff]
        %v403 = vld [vmem:[%s1 + $0x28] sm:$0xff]
        %405 = vset.pattern.permute.xlu0 0
        %406 = vperm.xlu0 %405, %v402
        %v407 = vpop.permute.xlu0 %406
        %410 = vset.pattern.permute.xlu0 0
        %411 = vperm.xlu0 %410, %v403
        %v412 = vpop.permute.xlu0 %411
        %v416 = vunpack.c.l.b16 %v400
        %v417 = vunpack.c.l.b16 %v401
        %v418 = vpack.c.b16 %v417, %v416
        %vm419 = vcmask 130048
        %v421 = vsel %vm419, %v418, 0
        %423 = vmatprep.subr.bf16.mxu0 0
        %424 = vmatpush1.bf16.msra.mxu0 %v337
        %425 = vmatprep.subr.bf16.mxu0 0
        %426 = vmatpush1.bf16.msra.mxu0 0
        %427 = vmatprep.subr.bf16.mxu0 0
        %428 = vmatpush1.bf16.msra.mxu0 0
        %429 = vmatprep.subr.bf16.mxu0 0
        %430 = vmatpush1.bf16.msra.mxu0 0
        %431 = vmatprep.subr.bf16.mxu0 0
        %432 = vmatpush1.bf16.msra.mxu0 0
        %433 = vmatprep.subr.bf16.mxu0 0
        %434 = vmatpush1.bf16.msra.mxu0 0
        %435 = vmatprep.subr.bf16.mxu0 0
        %436 = vmatpush1.bf16.msra.mxu0 0
        %437 = vmatprep.subr.bf16.mxu0 0
        %438 = vmatpush1.bf16.msra.mxu0 0
        %439 = vmatprep.subr.bf16.mxu0 0
        %440 = vmatpush1.bf16.msra.mxu0 0
        %441 = vmatprep.subr.bf16.mxu0 0
        %442 = vmatpush1.bf16.msra.mxu0 0
        %443 = vmatprep.subr.bf16.mxu0 0
        %444 = vmatpush1.bf16.msra.mxu0 0
        %445 = vmatprep.subr.bf16.mxu0 0
        %446 = vmatpush1.bf16.msra.mxu0 0
        %447 = vmatprep.subr.bf16.mxu0 0
        %448 = vmatpush1.bf16.msra.mxu0 0
        %449 = vmatprep.subr.bf16.mxu0 0
        %450 = vmatpush1.bf16.msra.mxu0 0
        %451 = vmatprep.subr.bf16.mxu0 0
        %452 = vmatpush1.bf16.msra.mxu0 0
        %453 = vmatprep.subr.bf16.mxu0 0
        %454 = vmatpush1.bf16.msra.mxu0 0
        %455 = vmatprep.mubr.bf16.mxu0 0
        %456 = vmatmul.mubr.bf16.gmra.mrb[0].mxu0 %v421
        %v457 = vpop.f32.mrb[0].mxu0
        %v458 = vadd.f32 %v407, %v457
        %v459 = vpop.f32.mrb[0].mxu0
        %v460 = vpop.f32.mrb[0].mxu0
        %v461 = vadd.f32 %v412, %v460
        %v462 = vpop.f32.mrb[0].mxu0
        %463 = vdwg.mxu0
        %v464 = vmax.f32 %v394, 0.0
        %v465 = vmax.f32 %v397, 0.0
        %466 = vrot.lane.b32.xlu0 %v464, 1
        %v467 = vpop.permute.xlu0 %466
        %468 = vrot.lane.b32.xlu0 %v465, 1
        %v469 = vpop.permute.xlu0 %468
        %v470 = vsel %vm327, %v467, 0.0
        %v471 = vsel %vm327, %v469, 0.0
        %v472 = vpack.c.bf16 %v471, %v470
        %473 = vst [vmem:[#allocation2] sm:$0xff] %v472
        %v474 = vpack.c.bf16 %v465, %v464
        %475 = vst [vmem:[#allocation2 + $0x8] sm:$0xff] %v474
        %v476 = vld [vmem:[%s3] sm:$0xf]
        %v477 = vld [vmem:[%s3 + $0x4] sm:$0xf]
        %v478 = vld [vmem:[#allocation2] sm:$0xff]
        %v479 = vld [vmem:[#allocation2 + $0x8] sm:$0xff]
        %v480 = vld [vmem:[%s1 + $0x10] sm:$0xff]
        %v481 = vld [vmem:[%s1 + $0x18] sm:$0xff]
        %483 = vset.pattern.permute.xlu0 0
        %484 = vperm.xlu0 %483, %v480
        %v485 = vpop.permute.xlu0 %484
        %488 = vset.pattern.permute.xlu0 0
        %489 = vperm.xlu0 %488, %v481
        %v490 = vpop.permute.xlu0 %489
        %v494 = vunpack.c.l.b16 %v476
        %v495 = vunpack.c.l.b16 %v477
        %v496 = vpack.c.b16 %v495, %v494
        %v498 = vsel %vm355, %v496, 0
        %500 = vmatprep.subr.bf16.mxu0 0
        %501 = vmatpush1.bf16.msra.mxu0 %v478
        %502 = vmatprep.subr.bf16.mxu0 0
        %503 = vmatpush1.bf16.msra.mxu0 %v479
        %504 = vmatprep.subr.bf16.mxu0 0
        %505 = vmatpush1.bf16.msra.mxu0 0
        %506 = vmatprep.subr.bf16.mxu0 0
        %507 = vmatpush1.bf16.msra.mxu0 0
        %508 = vmatprep.subr.bf16.mxu0 0
        %509 = vmatpush1.bf16.msra.mxu0 0
        %510 = vmatprep.subr.bf16.mxu0 0
        %511 = vmatpush1.bf16.msra.mxu0 0
        %512 = vmatprep.subr.bf16.mxu0 0
        %513 = vmatpush1.bf16.msra.mxu0 0
        %514 = vmatprep.subr.bf16.mxu0 0
        %515 = vmatpush1.bf16.msra.mxu0 0
        %516 = vmatprep.subr.bf16.mxu0 0
        %517 = vmatpush1.bf16.msra.mxu0 0
        %518 = vmatprep.subr.bf16.mxu0 0
        %519 = vmatpush1.bf16.msra.mxu0 0
        %520 = vmatprep.subr.bf16.mxu0 0
        %521 = vmatpush1.bf16.msra.mxu0 0
        %522 = vmatprep.subr.bf16.mxu0 0
        %523 = vmatpush1.bf16.msra.mxu0 0
        %524 = vmatprep.subr.bf16.mxu0 0
        %525 = vmatpush1.bf16.msra.mxu0 0
        %526 = vmatprep.subr.bf16.mxu0 0
        %527 = vmatpush1.bf16.msra.mxu0 0
        %528 = vmatprep.subr.bf16.mxu0 0
        %529 = vmatpush1.bf16.msra.mxu0 0
        %530 = vmatprep.subr.bf16.mxu0 0
        %531 = vmatpush1.bf16.msra.mxu0 0
        %532 = vmatprep.mubr.bf16.mxu0 0
        %533 = vmatmul.mubr.bf16.gmra.mrb[0].mxu0 %v498
        %v534 = vpop.f32.mrb[0].mxu0
        %v535 = vadd.f32 %v485, %v534
        %v536 = vpop.f32.mrb[0].mxu0
        %v537 = vpop.f32.mrb[0].mxu0
        %v538 = vadd.f32 %v490, %v537
        %v539 = vpop.f32.mrb[0].mxu0
        %540 = vdwg.mxu0
        %v541 = vmax.f32 %v535, 0.0
        %v542 = vmax.f32 %v538, 0.0
        %v543 = vadd.f32 %v541, %v458
        %v544 = vadd.f32 %v542, %v461
        %v545 = vmax.f32 %v543, 0.0
        %v546 = vmax.f32 %v544, 0.0
        %547 = vrot.lane.b32.xlu0 %v545, 2
        %v548 = vpop.permute.xlu0 %547
        %549 = vrot.lane.b32.xlu0 %v546, 2
        %v550 = vpop.permute.xlu0 %549
        %v551 = vsel %vm319, 1, 0
        %vm552 = vcmp.eq.s32.totalorder %v551, 1
        %v553 = vsel %vm552, %v548, 0.0
        %v554 = vsel %vm552, %v550, 0.0
        %v555 = vpack.c.bf16 %v554, %v553
        %556 = vst [vmem:[#allocation2] sm:$0xff] %v555
        %v557 = vpack.c.bf16 %v546, %v545
        %558 = vst [vmem:[#allocation2 + $0x8] sm:$0xff] %v557
        %v559 = vld [vmem:[%s5] sm:$0xf]
        %v560 = vld [vmem:[%s5 + $0x4] sm:$0xf]
        %v561 = vld [vmem:[#allocation2] sm:$0xff]
        %v562 = vld [vmem:[#allocation2 + $0x8] sm:$0xff]
        %v563 = vld [vmem:[%s1 + $0x30] sm:$0xff]
        %v564 = vld [vmem:[%s1 + $0x38] sm:$0xff]
        %566 = vset.pattern.permute.xlu0 0
        %567 = vperm.xlu0 %566, %v563
        %v568 = vpop.permute.xlu0 %567
        %571 = vset.pattern.permute.xlu0 0
        %572 = vperm.xlu0 %571, %v564
        %v573 = vpop.permute.xlu0 %572
        %v577 = vunpack.c.l.b16 %v559
        %v578 = vunpack.c.l.b16 %v560
        %v579 = vpack.c.b16 %v578, %v577
        %v581 = vsel %vm355, %v579, 0
        %583 = vmatprep.subr.bf16.mxu0 0
        %584 = vmatpush1.bf16.msra.mxu0 %v561
        %585 = vmatprep.subr.bf16.mxu0 0
        %586 = vmatpush1.bf16.msra.mxu0 %v562
        %587 = vmatprep.subr.bf16.mxu0 0
        %588 = vmatpush1.bf16.msra.mxu0 0
        %589 = vmatprep.subr.bf16.mxu0 0
        %590 = vmatpush1.bf16.msra.mxu0 0
        %591 = vmatprep.subr.bf16.mxu0 0
        %592 = vmatpush1.bf16.msra.mxu0 0
        %593 = vmatprep.subr.bf16.mxu0 0
        %594 = vmatpush1.bf16.msra.mxu0 0
        %595 = vmatprep.subr.bf16.mxu0 0
        %596 = vmatpush1.bf16.msra.mxu0 0
        %597 = vmatprep.subr.bf16.mxu0 0
        %598 = vmatpush1.bf16.msra.mxu0 0
        %599 = vmatprep.subr.bf16.mxu0 0
        %600 = vmatpush1.bf16.msra.mxu0 0
        %601 = vmatprep.subr.bf16.mxu0 0
        %602 = vmatpush1.bf16.msra.mxu0 0
        %603 = vmatprep.subr.bf16.mxu0 0
        %604 = vmatpush1.bf16.msra.mxu0 0
        %605 = vmatprep.subr.bf16.mxu0 0
        %606 = vmatpush1.bf16.msra.mxu0 0
        %607 = vmatprep.subr.bf16.mxu0 0
        %608 = vmatpush1.bf16.msra.mxu0 0
        %609 = vmatprep.subr.bf16.mxu0 0
        %610 = vmatpush1.bf16.msra.mxu0 0
        %611 = vmatprep.subr.bf16.mxu0 0
        %612 = vmatpush1.bf16.msra.mxu0 0
        %613 = vmatprep.subr.bf16.mxu0 0
        %614 = vmatpush1.bf16.msra.mxu0 0
        %615 = vmatprep.mubr.bf16.mxu0 0
        %616 = vmatmul.mubr.bf16.gmra.mrb[0].mxu0 %v581
        %v617 = vpop.f32.mrb[0].mxu0
        %v618 = vadd.f32 %v568, %v617
        %v619 = vpop.f32.mrb[0].mxu0
        %v620 = vpop.f32.mrb[0].mxu0
        %v621 = vadd.f32 %v573, %v620
        %v622 = vpop.f32.mrb[0].mxu0
        %623 = vdwg.mxu0
        %v624 = vmax.f32 %v618, 0.0
        %v625 = vmax.f32 %v621, 0.0
        %626 = vrot.lane.b32.xlu0 %v624, 2
        %v627 = vpop.permute.xlu0 %626
        %628 = vrot.lane.b32.xlu0 %v625, 2
        %v629 = vpop.permute.xlu0 %628
        %v630 = vsel %vm552, %v627, 0.0
        %v631 = vsel %vm552, %v629, 0.0
        %v632 = vpack.c.bf16 %v631, %v630
        %633 = vst [vmem:[#allocation2] sm:$0xff] %v632
        %v634 = vpack.c.bf16 %v625, %v624
        %635 = vst [vmem:[#allocation2 + $0x8] sm:$0xff] %v634
        %v636 = vld [vmem:[%s6] sm:$0xf]
        %v637 = vld [vmem:[%s6 + $0x4] sm:$0xf]
        %v638 = vld [vmem:[#allocation2] sm:$0xff]
        %v639 = vld [vmem:[#allocation2 + $0x8] sm:$0xff]
        %v640 = vld [vmem:[%s1 + $0x40] sm:$0xff]
        %v641 = vld [vmem:[%s1 + $0x48] sm:$0xff]
        %643 = vset.pattern.permute.xlu0 0
        %644 = vperm.xlu0 %643, %v640
        %v645 = vpop.permute.xlu0 %644
        %648 = vset.pattern.permute.xlu0 0
        %649 = vperm.xlu0 %648, %v641
        %v650 = vpop.permute.xlu0 %649
        %v654 = vunpack.c.l.b16 %v636
        %v655 = vunpack.c.l.b16 %v637
        %v656 = vpack.c.b16 %v655, %v654
        %v658 = vsel %vm355, %v656, 0
        %660 = vmatprep.subr.bf16.mxu0 0
        %661 = vmatpush1.bf16.msra.mxu0 %v638
        %662 = vmatprep.subr.bf16.mxu0 0
        %663 = vmatpush1.bf16.msra.mxu0 %v639
        %664 = vmatprep.subr.bf16.mxu0 0
        %665 = vmatpush1.bf16.msra.mxu0 0
        %666 = vmatprep.subr.bf16.mxu0 0
        %667 = vmatpush1.bf16.msra.mxu0 0
        %668 = vmatprep.subr.bf16.mxu0 0
        %669 = vmatpush1.bf16.msra.mxu0 0
        %670 = vmatprep.subr.bf16.mxu0 0
        %671 = vmatpush1.bf16.msra.mxu0 0
        %672 = vmatprep.subr.bf16.mxu0 0
        %673 = vmatpush1.bf16.msra.mxu0 0
        %674 = vmatprep.subr.bf16.mxu0 0
        %675 = vmatpush1.bf16.msra.mxu0 0
        %676 = vmatprep.subr.bf16.mxu0 0
        %677 = vmatpush1.bf16.msra.mxu0 0
        %678 = vmatprep.subr.bf16.mxu0 0
        %679 = vmatpush1.bf16.msra.mxu0 0
        %680 = vmatprep.subr.bf16.mxu0 0
        %681 = vmatpush1.bf16.msra.mxu0 0
        %682 = vmatprep.subr.bf16.mxu0 0
        %683 = vmatpush1.bf16.msra.mxu0 0
        %684 = vmatprep.subr.bf16.mxu0 0
        %685 = vmatpush1.bf16.msra.mxu0 0
        %686 = vmatprep.subr.bf16.mxu0 0
        %687 = vmatpush1.bf16.msra.mxu0 0
        %688 = vmatprep.subr.bf16.mxu0 0
        %689 = vmatpush1.bf16.msra.mxu0 0
        %690 = vmatprep.subr.bf16.mxu0 0
        %691 = vmatpush1.bf16.msra.mxu0 0
        %692 = vmatprep.mubr.bf16.mxu0 0
        %693 = vmatmul.mubr.bf16.gmra.mrb[0].mxu0 %v658
        %v694 = vpop.f32.mrb[0].mxu0
        %v695 = vadd.f32 %v645, %v694
        %v696 = vpop.f32.mrb[0].mxu0
        %v697 = vpop.f32.mrb[0].mxu0
        %v698 = vadd.f32 %v650, %v697
        %v699 = vpop.f32.mrb[0].mxu0
        %700 = vdwg.mxu0
        %v701 = vmax.f32 %v695, 0.0
        %v702 = vmax.f32 %v698, 0.0
        %v703 = vadd.f32 %v701, %v545
        %v704 = vadd.f32 %v702, %v546
        %v705 = vmax.f32 %v703, 0.0
        %v706 = vmax.f32 %v704, 0.0
        %707 = vst [vmem:[%s314] sm:$0xff] %v705
        %708 = vst [vmem:[%s314 + $0x8] sm:$0xff] %v706
        %s709 = sand.u32 %s181, 1
        %s710 = scalar_lea.sflag [#allocation5], %s709
        %s711 = sand.u32 %s181, 1
        %s712 = smul.addr %s711, 16
        %s713 = scalar_lea.vmem [#allocation4], %s712
        // Predicated region
        $region87: #{tpu_custom_call.1} parent=81 // pred_check
          %p714 = pneg %p191
        $region88: #{tpu_custom_call.1} parent=81 // pred_check_branch
          %716 = sbr.rel (%p714) target = $region90
        $region89: #{tpu_custom_call.1} parent=81 // pred_region
          %s718 = ssub.s32 256, 256
          %719 = vsyncadd %s710, %s718
          %s720 = smul.addr %s21, 128
          %s721 = scalar_lea.hbm %s7, %s720
          %s722 = sshll.u32 %s713, 4
          %s723 = int_to_ptr.vmem [resolvable:$true] %s722
          %728 = dma.vmem_to_hbm [thread:$0]  %s723, 256, %s721, %s710, 128, 256, 8
        $region90: #{tpu_custom_call.1} parent=81 // pred_fallthru
          _
      $region82: #{tpu_custom_call.1} parent=5 // pred_fallthru
        _
      %p729 = scmp.le.s32.totalorder 2, %s16
      // Predicated region
      $region91: #{tpu_custom_call.1} parent=5 // pred_check
        %p730 = pneg %p729
      $region92: #{tpu_custom_call.1} parent=5 // pred_check_branch
        %732 = sbr.rel (%p730) target = $region94
      $region93: #{tpu_custom_call.1} parent=5 // pred_region
        %s733 = ssub.s32 %s16, 2
        // Predicated region
        $region95: #{tpu_custom_call.1} parent=93 // pred_check
          %p734 = pneg %p197
        $region96: #{tpu_custom_call.1} parent=93 // pred_check_branch
          %736 = sbr.rel (%p734) target = $region98
        $region97: #{tpu_custom_call.1} parent=93 // pred_region
          %s737 = sand.u32 %s182, 1
          %s738 = scalar_lea.sflag [#allocation5], %s737
          %s739 = sand.u32 %s182, 1
          %s740 = smul.addr %s739, 16
          %s741 = scalar_lea.vmem [#allocation4], %s740
          %742 = dma.done %s738, 256
        $region98: #{tpu_custom_call.1} parent=93 // pred_fallthru
          _
      $region94: #{tpu_custom_call.1} parent=5 // pred_fallthru
        _
    $region6: #{tpu_custom_call.1} parent=1 // loop_footer
      %s20 = sadd.s32 1, %s16
    $region7: #{tpu_custom_call.1} parent=1 // loop_footer_branch
      %15 = sbr.rel target = $region3
    $region8: #{tpu_custom_call.1} parent=1 // loop_exit
      _
    %743 = vsyncpa [#allocation5], 1
    %s744 = scalar_lea.sflag [#allocation5], 1
    %745 = vsyncpa %s744, 1

// kernel: tpu_custom_call.1
$region0: #{tpu_custom_call.1}
  #allocation0 [shape = 'u32[]', space=smem, size = 0x4, offset = 0x4, fixed_abs, tag = 'smem constant byte address 0x4 - core index']
  #allocation1 [shape = 'u32[144,128]{1,0:T(1,128)}', space=vmem, size = 0x12000, scoped, tag = 'internal scratch']
  #allocation2 [shape = 'bf16[32,128]{1,0:T(16,128)(2,1)}', space=vmem, size = 0x2000, scoped, tag = 'scratch operand']
  %s0 = inlined_call_operand.vmem [shape: f32[16,256], index: 0, kind: input, shape index: {}]
  %s1 = inlined_call_operand.vmem [shape: f32[80,1], index: 1, kind: input, shape index: {}]
  %s2 = inlined_call_operand.vmem [shape: bf16[16,32], index: 2, kind: input, shape index: {}]
  %s3 = inlined_call_operand.vmem [shape: bf16[16,32], index: 3, kind: input, shape index: {}]
  %s4 = inlined_call_operand.vmem [shape: bf16[16,16], index: 4, kind: input, shape index: {}]
  %s5 = inlined_call_operand.vmem [shape: bf16[16,32], index: 5, kind: input, shape index: {}]
  %s6 = inlined_call_operand.vmem [shape: bf16[16,32], index: 6, kind: input, shape index: {}]
  %s7 = inlined_call_operand.hbm [shape: f32[16,256], index: 7, kind: output, shape index: {}]
  %s8 = sld [smem:[#allocation0]]
  $region99: #{tpu_custom_call.1} parent=0
    _
  %s10 = ssub.s32 1, %s8
  %s11 = scalar_select 0, %s10, %s8
  $region1: #{tpu_custom_call.1} parent=0
    #allocation3 [shape = 'u8[16384]{0}', space=vmem, size = 0x4000, scoped, tag = 'input window, operand 0']
    #allocation4 [shape = 'u8[16384]{0}', space=vmem, size = 0x4000, scoped, tag = 'output window, operand 0']
    #allocation5 [shape = 's32[2]{0}', space=sflag, size = 0x8, scoped, tag = 'scoped memory for tpu_custom_call.1']
    %12 = vsyncpa [#allocation5], 0
    %s13 = scalar_lea.sflag [#allocation5], 1
    %14 = vsyncpa %s13, 0
    loop: start=0, step=1, limit=4
    $region2: #{tpu_custom_call.1} parent=1 // loop_pre_header
      _
    $region3: #{tpu_custom_call.1} parent=1 // loop_header
      %s16 = sphi 0, %s20
      %p17 = scmp.ge.s32.totalorder %s16, 4
      %s26 = sphi 0, %s28
      %s29 = sphi 0, %s26
      %s30 = sphi 0, %s29
      %s46 = sphi 0, %s30
      %s50 = sphi 0, %s50
      %s52 = sphi 0, %s50
      %s53 = sphi 0, %s52
      %s67 = sphi 0, %s53
      %s71 = sphi 0, %s71
      %s73 = sphi 0, %s71
      %s74 = sphi 0, %s73
      %s88 = sphi 0, %s74
      %s92 = sphi 0, %s92
      %s94 = sphi 0, %s92
      %s95 = sphi 0, %s94
      %s109 = sphi 0, %s95
      %s113 = sphi 0, %s113
      %s115 = sphi 0, %s113
      %s116 = sphi 0, %s115
      %s130 = sphi 0, %s116
      %s134 = sphi 0, %s134
      %s136 = sphi 0, %s134
      %s137 = sphi 0, %s136
      %s151 = sphi 0, %s137
      %s155 = sphi 0, %s155
      %s157 = sphi 0, %s155
      %s158 = sphi 0, %s157
      %s172 = sphi 0, %s158
      %s178 = sphi 0, %s180
      %s181 = sphi 0, %s178
      %s182 = sphi 0, %s181
      %s198 = sphi 0, %s182
    $region4: #{tpu_custom_call.1} parent=1 // loop_header_branch
      %19 = sbr.rel (%p17) target = $region8
    $region5: #{tpu_custom_call.1} parent=1 // loop_body
      %s21 = ssub.s32 %s16, 1
      %s22 = ssub.s32 %s16, 2
      %s23 = sadd.s32 %s16, 1
      %s24 = ssub.s32 %s16, %s23
      %p25 = scmp.eq.s32.totalorder %s24, 0
      %s27 = sadd.s32 %s26, 1
      %s28 = scalar_select %p25, %s26, %s27
      %p31 = pneg %p25
      %p32 = scmp.eq.s32.totalorder %s16, 1
      %p33 = por %p31, %p32
      %p34 = scmp.ne.s32.totalorder %s26, %s29
      %p35 = scmp.eq.s32.totalorder %s16, 0
      %p36 = por %p34, %p35
      %p37 = scmp.ne.s32.totalorder %s26, %s29
      %p38 = scmp.eq.s32.totalorder %s21, 1
      %p39 = por %p37, %p38
      %p40 = scmp.ne.s32.totalorder %s29, %s30
      %p41 = scmp.eq.s32.totalorder %s21, 0
      %p42 = por %p40, %p41
      %p43 = scmp.ne.s32.totalorder %s29, %s30
      %p44 = scmp.eq.s32.totalorder %s22, 1
      %p45 = por %p43, %p44
      %p47 = scmp.ne.s32.totalorder %s30, %s46
      %p48 = scmp.eq.s32.totalorder %s22, 0
      %p49 = por %p47, %p48
      %s51 = sadd.s32 %s50, 1
      %p54 = scmp.eq.s32.totalorder %s16, 1
      %p55 = scmp.ne.s32.totalorder %s50, %s52
      %p56 = scmp.eq.s32.totalorder %s16, 0
      %p57 = por %p55, %p56
      %p58 = scmp.ne.s32.totalorder %s50, %s52
      %p59 = scmp.eq.s32.totalorder %s21, 1
      %p60 = por %p58, %p59
      %p61 = scmp.ne.s32.totalorder %s52, %s53
      %p62 = scmp.eq.s32.totalorder %s21, 0
      %p63 = por %p61, %p62
      %p64 = scmp.ne.s32.totalorder %s52, %s53
      %p65 = scmp.eq.s32.totalorder %s22, 1
      %p66 = por %p64, %p65
      %p68 = scmp.ne.s32.totalorder %s53, %s67
      %p69 = scmp.eq.s32.totalorder %s22, 0
      %p70 = por %p68, %p69
      %s72 = sadd.s32 %s71, 1
      %p75 = scmp.eq.s32.totalorder %s16, 1
      %p76 = scmp.ne.s32.totalorder %s71, %s73
      %p77 = scmp.eq.s32.totalorder %s16, 0
      %p78 = por %p76, %p77
      %p79 = scmp.ne.s32.totalorder %s71, %s73
      %p80 = scmp.eq.s32.totalorder %s21, 1
      %p81 = por %p79, %p80
      %p82 = scmp.ne.s32.totalorder %s73, %s74
      %p83 = scmp.eq.s32.totalorder %s21, 0
      %p84 = por %p82, %p83
      %p85 = scmp.ne.s32.totalorder %s73, %s74
      %p86 = scmp.eq.s32.totalorder %s22, 1
      %p87 = por %p85, %p86
      %p89 = scmp.ne.s32.totalorder %s74, %s88
      %p90 = scmp.eq.s32.totalorder %s22, 0
      %p91 = por %p89, %p90
      %s93 = sadd.s32 %s92, 1
      %p96 = scmp.eq.s32.totalorder %s16, 1
      %p97 = scmp.ne.s32.totalorder %s92, %s94
      %p98 = scmp.eq.s32.totalorder %s16, 0
      %p99 = por %p97, %p98
      %p100 = scmp.ne.s32.totalorder %s92, %s94
      %p101 = scmp.eq.s32.totalorder %s21, 1
      %p102 = por %p100, %p101
      %p103 = scmp.ne.s32.totalorder %s94, %s95
      %p104 = scmp.eq.s32.totalorder %s21, 0
      %p105 = por %p103, %p104
      %p106 = scmp.ne.s32.totalorder %s94, %s95
      %p107 = scmp.eq.s32.totalorder %s22, 1
      %p108 = por %p106, %p107
      %p110 = scmp.ne.s32.totalorder %s95, %s109
      %p111 = scmp.eq.s32.totalorder %s22, 0
      %p112 = por %p110, %p111
      %s114 = sadd.s32 %s113, 1
      %p117 = scmp.eq.s32.totalorder %s16, 1
      %p118 = scmp.ne.s32.totalorder %s113, %s115
      %p119 = scmp.eq.s32.totalorder %s16, 0
      %p120 = por %p118, %p119
      %p121 = scmp.ne.s32.totalorder %s113, %s115
      %p122 = scmp.eq.s32.totalorder %s21, 1
      %p123 = por %p121, %p122
      %p124 = scmp.ne.s32.totalorder %s115, %s116
      %p125 = scmp.eq.s32.totalorder %s21, 0
      %p126 = por %p124, %p125
      %p127 = scmp.ne.s32.totalorder %s115, %s116
      %p128 = scmp.eq.s32.totalorder %s22, 1
      %p129 = por %p127, %p128
      %p131 = scmp.ne.s32.totalorder %s116, %s130
      %p132 = scmp.eq.s32.totalorder %s22, 0
      %p133 = por %p131, %p132
      %s135 = sadd.s32 %s134, 1
      %p138 = scmp.eq.s32.totalorder %s16, 1
      %p139 = scmp.ne.s32.totalorder %s134, %s136
      %p140 = scmp.eq.s32.totalorder %s16, 0
      %p141 = por %p139, %p140
      %p142 = scmp.ne.s32.totalorder %s134, %s136
      %p143 = scmp.eq.s32.totalorder %s21, 1
      %p144 = por %p142, %p143
      %p145 = scmp.ne.s32.totalorder %s136, %s137
      %p146 = scmp.eq.s32.totalorder %s21, 0
      %p147 = por %p145, %p146
      %p148 = scmp.ne.s32.totalorder %s136, %s137
      %p149 = scmp.eq.s32.totalorder %s22, 1
      %p150 = por %p148, %p149
      %p152 = scmp.ne.s32.totalorder %s137, %s151
      %p153 = scmp.eq.s32.totalorder %s22, 0
      %p154 = por %p152, %p153
      %s156 = sadd.s32 %s155, 1
      %p159 = scmp.eq.s32.totalorder %s16, 1
      %p160 = scmp.ne.s32.totalorder %s155, %s157
      %p161 = scmp.eq.s32.totalorder %s16, 0
      %p162 = por %p160, %p161
      %p163 = scmp.ne.s32.totalorder %s155, %s157
      %p164 = scmp.eq.s32.totalorder %s21, 1
      %p165 = por %p163, %p164
      %p166 = scmp.ne.s32.totalorder %s157, %s158
      %p167 = scmp.eq.s32.totalorder %s21, 0
      %p168 = por %p166, %p167
      %p169 = scmp.ne.s32.totalorder %s157, %s158
      %p170 = scmp.eq.s32.totalorder %s22, 1
      %p171 = por %p169, %p170
      %p173 = scmp.ne.s32.totalorder %s158, %s172
      %p174 = scmp.eq.s32.totalorder %s22, 0
      %p175 = por %p173, %p174
      %s176 = ssub.s32 %s16, %s23
      %p177 = scmp.eq.s32.totalorder %s176, 0
      %s179 = sadd.s32 %s178, 1
      %s180 = scalar_select %p177, %s178, %s179
      %p183 = pneg %p177
      %p184 = scmp.eq.s32.totalorder %s16, 1
      %p185 = por %p183, %p184
      %p186 = scmp.ne.s32.totalorder %s178, %s181
      %p187 = scmp.eq.s32.totalorder %s16, 0
      %p188 = por %p186, %p187
      %p189 = scmp.ne.s32.totalorder %s178, %s181
      %p190 = scmp.eq.s32.totalorder %s21, 1
      %p191 = por %p189, %p190
      %p192 = scmp.ne.s32.totalorder %s181, %s182
      %p193 = scmp.eq.s32.totalorder %s21, 0
      %p194 = por %p192, %p193
      %p195 = scmp.ne.s32.totalorder %s181, %s182
      %p196 = scmp.eq.s32.totalorder %s22, 1
      %p197 = por %p195, %p196
      %p199 = scmp.ne.s32.totalorder %s182, %s198
      %p200 = scmp.eq.s32.totalorder %s22, 0
      %p201 = por %p199, %p200
      %p202 = scmp.le.s32.totalorder 1, %s16
      %p203 = scmp.lt.s32.totalorder %s16, 3
      %p204 = pnand %p202, %p203
      %p205 = pneg %p204
      // Predicated region
      $region9: #{tpu_custom_call.1} parent=5 // pred_check
        _
      $region10: #{tpu_custom_call.1} parent=5 // pred_check_branch
        %207 = sbr.rel (%p204) target = $region12
      $region11: #{tpu_custom_call.1} parent=5 // pred_region
        %s208 = ssub.s32 %s16, 1
        // Predicated region
        $region13: #{tpu_custom_call.1} parent=11 // pred_check
          %p209 = pneg %p63
        $region14: #{tpu_custom_call.1} parent=11 // pred_check_branch
          %211 = sbr.rel (%p209) target = $region16
        $region15: #{tpu_custom_call.1} parent=11 // pred_region
          _
        $region16: #{tpu_custom_call.1} parent=11 // pred_fallthru
          _
        // Predicated region
        $region17: #{tpu_custom_call.1} parent=11 // pred_check
          %p212 = pneg %p84
        $region18: #{tpu_custom_call.1} parent=11 // pred_check_branch
          %214 = sbr.rel (%p212) target = $region20
        $region19: #{tpu_custom_call.1} parent=11 // pred_region
          _
        $region20: #{tpu_custom_call.1} parent=11 // pred_fallthru
          _
        // Predicated region
        $region21: #{tpu_custom_call.1} parent=11 // pred_check
          %p215 = pneg %p105
        $region22: #{tpu_custom_call.1} parent=11 // pred_check_branch
          %217 = sbr.rel (%p215) target = $region24
        $region23: #{tpu_custom_call.1} parent=11 // pred_region
          _
        $region24: #{tpu_custom_call.1} parent=11 // pred_fallthru
          _
        // Predicated region
        $region25: #{tpu_custom_call.1} parent=11 // pred_check
          %p218 = pneg %p126
        $region26: #{tpu_custom_call.1} parent=11 // pred_check_branch
          %220 = sbr.rel (%p218) target = $region28
        $region27: #{tpu_custom_call.1} parent=11 // pred_region
          _
        $region28: #{tpu_custom_call.1} parent=11 // pred_fallthru
          _
        // Predicated region
        $region29: #{tpu_custom_call.1} parent=11 // pred_check
          %p221 = pneg %p147
        $region30: #{tpu_custom_call.1} parent=11 // pred_check_branch
          %223 = sbr.rel (%p221) target = $region32
        $region31: #{tpu_custom_call.1} parent=11 // pred_region
          _
        $region32: #{tpu_custom_call.1} parent=11 // pred_fallthru
          _
        // Predicated region
        $region33: #{tpu_custom_call.1} parent=11 // pred_check
          %p224 = pneg %p168
        $region34: #{tpu_custom_call.1} parent=11 // pred_check_branch
          %226 = sbr.rel (%p224) target = $region36
        $region35: #{tpu_custom_call.1} parent=11 // pred_region
          _
        $region36: #{tpu_custom_call.1} parent=11 // pred_fallthru
          _
      $region12: #{tpu_custom_call.1} parent=5 // pred_fallthru
        _
      %p227 = scmp.lt.s32.totalorder %s16, 2
      // Predicated region
      $region37: #{tpu_custom_call.1} parent=5 // pred_check
        %p228 = pneg %p227
      $region38: #{tpu_custom_call.1} parent=5 // pred_check_branch
        %230 = sbr.rel (%p228) target = $region40
      $region39: #{tpu_custom_call.1} parent=5 // pred_region
        // Predicated region
        $region41: #{tpu_custom_call.1} parent=39 // pred_check
          %p231 = pneg %p36
        $region42: #{tpu_custom_call.1} parent=39 // pred_check_branch
          %233 = sbr.rel (%p231) target = $region44
        $region43: #{tpu_custom_call.1} parent=39 // pred_region
          %s234 = sand.u32 %s26, 1
          %s235 = sand.u32 %s26, 1
          %s236 = smul.addr %s235, 16
          %s237 = scalar_lea.vmem [#allocation3], %s236
          %s238 = smul.addr %s16, 8
          %s239 = scalar_lea.vmem %s0, %s238
          // Predicated region
          $region45: #{tpu_custom_call.1} parent=43 // pred_check
            _
          $region46: #{tpu_custom_call.1} parent=43 // pred_check_branch
            %241 = sbr.rel (0) target = $region48
          $region47: #{tpu_custom_call.1} parent=43 // pred_region
            // Predicated region
            $region49: #{tpu_custom_call.1} parent=47 // pred_check
              _
            $region50: #{tpu_custom_call.1} parent=47 // pred_check_branch
              %243 = sbr.rel (0) target = $region52
            $region51: #{tpu_custom_call.1} parent=47 // pred_region
              // Predicated region
              $region64: #{tpu_custom_call.1} parent=51 // pred_check
                _
              $region65: #{tpu_custom_call.1} parent=51 // pred_check_branch
                %260 = sbr.rel (0) target = $region67
              $region66: #{tpu_custom_call.1} parent=51 // pred_region
                loop: start=0, step=1, limit=1
                $region68: #{tpu_custom_call.1} parent=66 // loop_pre_header
                  _
                $region69: #{tpu_custom_call.1} parent=66 // loop_header
                  %s262 = sphi 0, %s266
                  %p263 = scmp.ge.s32.totalorder %s262, 1
                  %s267 = sphi %s239, %s239
                  %s268 = sphi %s237, %s237
                $region70: #{tpu_custom_call.1} parent=66 // loop_header_branch
                  %265 = sbr.rel (%p263) target = $region74
                $region71: #{tpu_custom_call.1} parent=66 // loop_body
                  %v269 = vld [vmem:[%s267] sm:$0xff]
                  %270 = vst [vmem:[%s268] sm:$0xff] %v269
                  %v271 = vld [vmem:[%s267 + $0x10] sm:$0xff]
                  %272 = vst [vmem:[%s268 + $0x8] sm:$0xff] %v271
                $region72: #{tpu_custom_call.1} parent=66 // loop_footer
                  %s266 = sadd.s32 1, %s262
                $region73: #{tpu_custom_call.1} parent=66 // loop_footer_branch
                  %261 = sbr.rel target = $region69
                $region74: #{tpu_custom_call.1} parent=66 // loop_exit
                  _
              $region67: #{tpu_custom_call.1} parent=51 // pred_fallthru
                _
              // Predicated region
              $region75: #{tpu_custom_call.1} parent=51 // pred_check
                _
              $region76: #{tpu_custom_call.1} parent=51 // pred_check_branch
                %274 = sbr.rel target = $region78
              $region77: #{tpu_custom_call.1} parent=51 // pred_region
                _
              $region78: #{tpu_custom_call.1} parent=51 // pred_fallthru
                _
            $region52: #{tpu_custom_call.1} parent=47 // pred_fallthru
              _
            // Predicated region
            $region53: #{tpu_custom_call.1} parent=47 // pred_check
              _
            $region54: #{tpu_custom_call.1} parent=47 // pred_check_branch
              %245 = sbr.rel target = $region56
            $region55: #{tpu_custom_call.1} parent=47 // pred_region
              loop: start=0, step=1, limit=1
              $region57: #{tpu_custom_call.1} parent=55 // loop_pre_header
                _
              $region58: #{tpu_custom_call.1} parent=55 // loop_header
                %s248 = sphi 0, %s252
                %p249 = scmp.ge.s32.totalorder %s248, 1
                %s253 = sphi %s239, %s239
                %s254 = sphi %s237, %s237
              $region59: #{tpu_custom_call.1} parent=55 // loop_header_branch
                %251 = sbr.rel (%p249) target = $region63
              $region60: #{tpu_custom_call.1} parent=55 // loop_body
                %v255 = vld [vmem:[%s253] sm:$0xff]
                %256 = vst [vmem:[%s254] sm:$0xff] %v255
                %v257 = vld [vmem:[%s253 + $0x10] sm:$0xff]
                %258 = vst [vmem:[%s254 + $0x8] sm:$0xff] %v257
              $region61: #{tpu_custom_call.1} parent=55 // loop_footer
                %s252 = sadd.s32 1, %s248
              $region62: #{tpu_custom_call.1} parent=55 // loop_footer_branch
                %247 = sbr.rel target = $region58
              $region63: #{tpu_custom_call.1} parent=55 // loop_exit
                _
            $region56: #{tpu_custom_call.1} parent=47 // pred_fallthru
              _
          $region48: #{tpu_custom_call.1} parent=43 // pred_fallthru
            _
          %275 = vnop
        $region44: #{tpu_custom_call.1} parent=39 // pred_fallthru
          _
      $region40: #{tpu_custom_call.1} parent=5 // pred_fallthru
        _
      %p276 = scmp.le.s32.totalorder 1, %s16
      %p277 = scmp.lt.s32.totalorder %s16, 3
      %p278 = pnand %p276, %p277
      %p279 = pneg %p278
      // Predicated region
      $region79: #{tpu_custom_call.1} parent=5 // pred_check
        _
      $region80: #{tpu_custom_call.1} parent=5 // pred_check_branch
        %281 = sbr.rel (%p278) target = $region82
      $region81: #{tpu_custom_call.1} parent=5 // pred_region
        %s282 = ssub.s32 %s16, 1
        %s283 = sand.u32 %s29, 1
        %s284 = sand.u32 %s29, 1
        %s285 = smul.addr %s284, 16
        %s286 = scalar_lea.vmem [#allocation3], %s285
        // Predicated region
        $region83: #{tpu_custom_call.1} parent=81 // pred_check
          %p287 = pneg %p42
        $region84: #{tpu_custom_call.1} parent=81 // pred_check_branch
          %289 = sbr.rel (%p287) target = $region86
        $region85: #{tpu_custom_call.1} parent=81 // pred_region
          _
        $region86: #{tpu_custom_call.1} parent=81 // pred_fallthru
          _
        %s290 = sand.u32 %s29, 1
        %s291 = sand.u32 %s29, 1
        %s292 = smul.addr %s291, 16
        %s293 = scalar_lea.vmem [#allocation3], %s292
        %p294 = pneg %p42
        %p295 = pneg %p39
        %p296 = pneg %p63
        %p297 = pneg %p60
        %p298 = pneg %p84
        %p299 = pneg %p81
        %p300 = pneg %p105
        %p301 = pneg %p102
        %p302 = pneg %p126
        %p303 = pneg %p123
        %p304 = pneg %p147
        %p305 = pneg %p144
        %p306 = pneg %p168
        %p307 = pneg %p165
        %p308 = pneg %p194
        %p309 = pneg %p191
        %s310 = sand.u32 %s181, 1
        %s311 = scalar_lea.sflag [#allocation5], %s310
        %s312 = sand.u32 %s181, 1
        %s313 = smul.addr %s312, 16
        %s314 = scalar_lea.vmem [#allocation4], %s313
        %v316 = vlaneseq
        %v317 = vand.u32 %v316, 127
        %vm318 = vcmp.ge.s32.totalorder %v317, 1
        %vm319 = vcmp.ge.s32.totalorder %v317, 2
        %v320 = vld [vmem:[%s286] sm:$0xff]
        %v321 = vld [vmem:[%s286 + $0x8] sm:$0xff]
        %322 = vrot.lane.b32.xlu0 %v320, 1
        %v323 = vpop.permute.xlu0 %322
        %324 = vrot.lane.b32.xlu0 %v321, 1
        %v325 = vpop.permute.xlu0 %324
        %v326 = vsel %vm318, 1, 0
        %vm327 = vcmp.eq.s32.totalorder %v326, 1
        %v328 = vsel %vm327, %v323, 0.0
        %v329 = vsel %vm327, %v325, 0.0
        %v330 = vpack.c.bf16 %v329, %v328
        %331 = vst [vmem:[#allocation2] sm:$0xff] %v330
        %v332 = vpack.c.bf16 %v321, %v320
        %333 = vst [vmem:[#allocation2 + $0x8] sm:$0xff] %v332
        %v334 = vld [vmem:[%s2] sm:$0xf]
        %v335 = vld [vmem:[%s2 + $0x4] sm:$0xf]
        %v336 = vld [vmem:[#allocation2] sm:$0xff]
        %v337 = vld [vmem:[#allocation2 + $0x8] sm:$0xff]
        %v338 = vld [vmem:[%s1] sm:$0xff]
        %v339 = vld [vmem:[%s1 + $0x8] sm:$0xff]
        %341 = vset.pattern.permute.xlu0 0
        %342 = vperm.xlu0 %341, %v338
        %v343 = vpop.permute.xlu0 %342
        %346 = vset.pattern.permute.xlu0 0
        %347 = vperm.xlu0 %346, %v339
        %v348 = vpop.permute.xlu0 %347
        %v352 = vunpack.c.l.b16 %v334
        %v353 = vunpack.c.l.b16 %v335
        %v354 = vpack.c.b16 %v353, %v352
        %vm355 = vcmask 261120
        %v357 = vsel %vm355, %v354, 0
        %359 = vmatprep.subr.bf16.mxu0 0
        %360 = vmatpush1.bf16.msra.mxu0 %v336
        %361 = vmatprep.subr.bf16.mxu0 0
        %362 = vmatpush1.bf16.msra.mxu0 %v337
        %363 = vmatprep.subr.bf16.mxu0 0
        %364 = vmatpush1.bf16.msra.mxu0 0
        %365 = vmatprep.subr.bf16.mxu0 0
        %366 = vmatpush1.bf16.msra.mxu0 0
        %367 = vmatprep.subr.bf16.mxu0 0
        %368 = vmatpush1.bf16.msra.mxu0 0
        %369 = vmatprep.subr.bf16.mxu0 0
        %370 = vmatpush1.bf16.msra.mxu0 0
        %371 = vmatprep.subr.bf16.mxu0 0
        %372 = vmatpush1.bf16.msra.mxu0 0
        %373 = vmatprep.subr.bf16.mxu0 0
        %374 = vmatpush1.bf16.msra.mxu0 0
        %375 = vmatprep.subr.bf16.mxu0 0
        %376 = vmatpush1.bf16.msra.mxu0 0
        %377 = vmatprep.subr.bf16.mxu0 0
        %378 = vmatpush1.bf16.msra.mxu0 0
        %379 = vmatprep.subr.bf16.mxu0 0
        %380 = vmatpush1.bf16.msra.mxu0 0
        %381 = vmatprep.subr.bf16.mxu0 0
        %382 = vmatpush1.bf16.msra.mxu0 0
        %383 = vmatprep.subr.bf16.mxu0 0
        %384 = vmatpush1.bf16.msra.mxu0 0
        %385 = vmatprep.subr.bf16.mxu0 0
        %386 = vmatpush1.bf16.msra.mxu0 0
        %387 = vmatprep.subr.bf16.mxu0 0
        %388 = vmatpush1.bf16.msra.mxu0 0
        %389 = vmatprep.subr.bf16.mxu0 0
        %390 = vmatpush1.bf16.msra.mxu0 0
        %391 = vmatprep.mubr.bf16.mxu0 0
        %392 = vmatmul.mubr.bf16.gmra.mrb[0].mxu0 %v357
        %v393 = vpop.f32.mrb[0].mxu0
        %v394 = vadd.f32 %v343, %v393
        %v395 = vpop.f32.mrb[0].mxu0
        %v396 = vpop.f32.mrb[0].mxu0
        %v397 = vadd.f32 %v348, %v396
        %v398 = vpop.f32.mrb[0].mxu0
        %399 = vdwg.mxu0
        %v400 = vld [vmem:[%s4] sm:$0xf]
        %v401 = vld [vmem:[%s4 + $0x4] sm:$0xf]
        %v402 = vld [vmem:[%s1 + $0x20] sm:$0xff]
        %v403 = vld [vmem:[%s1 + $0x28] sm:$0xff]
        %405 = vset.pattern.permute.xlu0 0
        %406 = vperm.xlu0 %405, %v402
        %v407 = vpop.permute.xlu0 %406
        %410 = vset.pattern.permute.xlu0 0
        %411 = vperm.xlu0 %410, %v403
        %v412 = vpop.permute.xlu0 %411
        %v416 = vunpack.c.l.b16 %v400
        %v417 = vunpack.c.l.b16 %v401
        %v418 = vpack.c.b16 %v417, %v416
        %vm419 = vcmask 130048
        %v421 = vsel %vm419, %v418, 0
        %423 = vmatprep.subr.bf16.mxu0 0
        %424 = vmatpush1.bf16.msra.mxu0 %v337
        %425 = vmatprep.subr.bf16.mxu0 0
        %426 = vmatpush1.bf16.msra.mxu0 0
        %427 = vmatprep.subr.bf16.mxu0 0
        %428 = vmatpush1.bf16.msra.mxu0 0
        %429 = vmatprep.subr.bf16.mxu0 0
        %430 = vmatpush1.bf16.msra.mxu0 0
        %431 = vmatprep.subr.bf16.mxu0 0
        %432 = vmatpush1.bf16.msra.mxu0 0
        %433 = vmatprep.subr.bf16.mxu0 0
        %434 = vmatpush1.bf16.msra.mxu0 0
        %435 = vmatprep.subr.bf16.mxu0 0
        %436 = vmatpush1.bf16.msra.mxu0 0
        %437 = vmatprep.subr.bf16.mxu0 0
        %438 = vmatpush1.bf16.msra.mxu0 0
        %439 = vmatprep.subr.bf16.mxu0 0
        %440 = vmatpush1.bf16.msra.mxu0 0
        %441 = vmatprep.subr.bf16.mxu0 0
        %442 = vmatpush1.bf16.msra.mxu0 0
        %443 = vmatprep.subr.bf16.mxu0 0
        %444 = vmatpush1.bf16.msra.mxu0 0
        %445 = vmatprep.subr.bf16.mxu0 0
        %446 = vmatpush1.bf16.msra.mxu0 0
        %447 = vmatprep.subr.bf16.mxu0 0
        %448 = vmatpush1.bf16.msra.mxu0 0
        %449 = vmatprep.subr.bf16.mxu0 0
        %450 = vmatpush1.bf16.msra.mxu0 0
        %451 = vmatprep.subr.bf16.mxu0 0
        %452 = vmatpush1.bf16.msra.mxu0 0
        %453 = vmatprep.subr.bf16.mxu0 0
        %454 = vmatpush1.bf16.msra.mxu0 0
        %455 = vmatprep.mubr.bf16.mxu0 0
        %456 = vmatmul.mubr.bf16.gmra.mrb[0].mxu0 %v421
        %v457 = vpop.f32.mrb[0].mxu0
        %v458 = vadd.f32 %v407, %v457
        %v459 = vpop.f32.mrb[0].mxu0
        %v460 = vpop.f32.mrb[0].mxu0
        %v461 = vadd.f32 %v412, %v460
        %v462 = vpop.f32.mrb[0].mxu0
        %463 = vdwg.mxu0
        %v464 = vmax.f32 %v394, 0.0
        %v465 = vmax.f32 %v397, 0.0
        %466 = vrot.lane.b32.xlu0 %v464, 1
        %v467 = vpop.permute.xlu0 %466
        %468 = vrot.lane.b32.xlu0 %v465, 1
        %v469 = vpop.permute.xlu0 %468
        %v470 = vsel %vm327, %v467, 0.0
        %v471 = vsel %vm327, %v469, 0.0
        %v472 = vpack.c.bf16 %v471, %v470
        %473 = vst [vmem:[#allocation2] sm:$0xff] %v472
        %v474 = vpack.c.bf16 %v465, %v464
        %475 = vst [vmem:[#allocation2 + $0x8] sm:$0xff] %v474
        %v476 = vld [vmem:[%s3] sm:$0xf]
        %v477 = vld [vmem:[%s3 + $0x4] sm:$0xf]
        %v478 = vld [vmem:[#allocation2] sm:$0xff]
        %v479 = vld [vmem:[#allocation2 + $0x8] sm:$0xff]
        %v480 = vld [vmem:[%s1 + $0x10] sm:$0xff]
        %v481 = vld [vmem:[%s1 + $0x18] sm:$0xff]
        %483 = vset.pattern.permute.xlu0 0
        %484 = vperm.xlu0 %483, %v480
        %v485 = vpop.permute.xlu0 %484
        %488 = vset.pattern.permute.xlu0 0
        %489 = vperm.xlu0 %488, %v481
        %v490 = vpop.permute.xlu0 %489
        %v494 = vunpack.c.l.b16 %v476
        %v495 = vunpack.c.l.b16 %v477
        %v496 = vpack.c.b16 %v495, %v494
        %v498 = vsel %vm355, %v496, 0
        %500 = vmatprep.subr.bf16.mxu0 0
        %501 = vmatpush1.bf16.msra.mxu0 %v478
        %502 = vmatprep.subr.bf16.mxu0 0
        %503 = vmatpush1.bf16.msra.mxu0 %v479
        %504 = vmatprep.subr.bf16.mxu0 0
        %505 = vmatpush1.bf16.msra.mxu0 0
        %506 = vmatprep.subr.bf16.mxu0 0
        %507 = vmatpush1.bf16.msra.mxu0 0
        %508 = vmatprep.subr.bf16.mxu0 0
        %509 = vmatpush1.bf16.msra.mxu0 0
        %510 = vmatprep.subr.bf16.mxu0 0
        %511 = vmatpush1.bf16.msra.mxu0 0
        %512 = vmatprep.subr.bf16.mxu0 0
        %513 = vmatpush1.bf16.msra.mxu0 0
        %514 = vmatprep.subr.bf16.mxu0 0
        %515 = vmatpush1.bf16.msra.mxu0 0
        %516 = vmatprep.subr.bf16.mxu0 0
        %517 = vmatpush1.bf16.msra.mxu0 0
        %518 = vmatprep.subr.bf16.mxu0 0
        %519 = vmatpush1.bf16.msra.mxu0 0
        %520 = vmatprep.subr.bf16.mxu0 0
        %521 = vmatpush1.bf16.msra.mxu0 0
        %522 = vmatprep.subr.bf16.mxu0 0
        %523 = vmatpush1.bf16.msra.mxu0 0
        %524 = vmatprep.subr.bf16.mxu0 0
        %525 = vmatpush1.bf16.msra.mxu0 0
        %526 = vmatprep.subr.bf16.mxu0 0
        %527 = vmatpush1.bf16.msra.mxu0 0
        %528 = vmatprep.subr.bf16.mxu0 0
        %529 = vmatpush1.bf16.msra.mxu0 0
        %530 = vmatprep.subr.bf16.mxu0 0
        %531 = vmatpush1.bf16.msra.mxu0 0
        %532 = vmatprep.mubr.bf16.mxu0 0
        %533 = vmatmul.mubr.bf16.gmra.mrb[0].mxu0 %v498
        %v534 = vpop.f32.mrb[0].mxu0
        %v535 = vadd.f32 %v485, %v534
        %v536 = vpop.f32.mrb[0].mxu0
        %v537 = vpop.f32.mrb[0].mxu0
        %v538 = vadd.f32 %v490, %v537
        %v539 = vpop.f32.mrb[0].mxu0
        %540 = vdwg.mxu0
        %v541 = vmax.f32 %v535, 0.0
        %v542 = vmax.f32 %v538, 0.0
        %v543 = vadd.f32 %v541, %v458
        %v544 = vadd.f32 %v542, %v461
        %v545 = vmax.f32 %v543, 0.0
        %v546 = vmax.f32 %v544, 0.0
        %547 = vrot.lane.b32.xlu0 %v545, 2
        %v548 = vpop.permute.xlu0 %547
        %549 = vrot.lane.b32.xlu0 %v546, 2
        %v550 = vpop.permute.xlu0 %549
        %v551 = vsel %vm319, 1, 0
        %vm552 = vcmp.eq.s32.totalorder %v551, 1
        %v553 = vsel %vm552, %v548, 0.0
        %v554 = vsel %vm552, %v550, 0.0
        %v555 = vpack.c.bf16 %v554, %v553
        %556 = vst [vmem:[#allocation2] sm:$0xff] %v555
        %v557 = vpack.c.bf16 %v546, %v545
        %558 = vst [vmem:[#allocation2 + $0x8] sm:$0xff] %v557
        %v559 = vld [vmem:[%s5] sm:$0xf]
        %v560 = vld [vmem:[%s5 + $0x4] sm:$0xf]
        %v561 = vld [vmem:[#allocation2] sm:$0xff]
        %v562 = vld [vmem:[#allocation2 + $0x8] sm:$0xff]
        %v563 = vld [vmem:[%s1 + $0x30] sm:$0xff]
        %v564 = vld [vmem:[%s1 + $0x38] sm:$0xff]
        %566 = vset.pattern.permute.xlu0 0
        %567 = vperm.xlu0 %566, %v563
        %v568 = vpop.permute.xlu0 %567
        %571 = vset.pattern.permute.xlu0 0
        %572 = vperm.xlu0 %571, %v564
        %v573 = vpop.permute.xlu0 %572
        %v577 = vunpack.c.l.b16 %v559
        %v578 = vunpack.c.l.b16 %v560
        %v579 = vpack.c.b16 %v578, %v577
        %v581 = vsel %vm355, %v579, 0
        %583 = vmatprep.subr.bf16.mxu0 0
        %584 = vmatpush1.bf16.msra.mxu0 %v561
        %585 = vmatprep.subr.bf16.mxu0 0
        %586 = vmatpush1.bf16.msra.mxu0 %v562
        %587 = vmatprep.subr.bf16.mxu0 0
        %588 = vmatpush1.bf16.msra.mxu0 0
        %589 = vmatprep.subr.bf16.mxu0 0
        %590 = vmatpush1.bf16.msra.mxu0 0
        %591 = vmatprep.subr.bf16.mxu0 0
        %592 = vmatpush1.bf16.msra.mxu0 0
        %593 = vmatprep.subr.bf16.mxu0 0
        %594 = vmatpush1.bf16.msra.mxu0 0
        %595 = vmatprep.subr.bf16.mxu0 0
        %596 = vmatpush1.bf16.msra.mxu0 0
        %597 = vmatprep.subr.bf16.mxu0 0
        %598 = vmatpush1.bf16.msra.mxu0 0
        %599 = vmatprep.subr.bf16.mxu0 0
        %600 = vmatpush1.bf16.msra.mxu0 0
        %601 = vmatprep.subr.bf16.mxu0 0
        %602 = vmatpush1.bf16.msra.mxu0 0
        %603 = vmatprep.subr.bf16.mxu0 0
        %604 = vmatpush1.bf16.msra.mxu0 0
        %605 = vmatprep.subr.bf16.mxu0 0
        %606 = vmatpush1.bf16.msra.mxu0 0
        %607 = vmatprep.subr.bf16.mxu0 0
        %608 = vmatpush1.bf16.msra.mxu0 0
        %609 = vmatprep.subr.bf16.mxu0 0
        %610 = vmatpush1.bf16.msra.mxu0 0
        %611 = vmatprep.subr.bf16.mxu0 0
        %612 = vmatpush1.bf16.msra.mxu0 0
        %613 = vmatprep.subr.bf16.mxu0 0
        %614 = vmatpush1.bf16.msra.mxu0 0
        %615 = vmatprep.mubr.bf16.mxu0 0
        %616 = vmatmul.mubr.bf16.gmra.mrb[0].mxu0 %v581
        %v617 = vpop.f32.mrb[0].mxu0
        %v618 = vadd.f32 %v568, %v617
        %v619 = vpop.f32.mrb[0].mxu0
        %v620 = vpop.f32.mrb[0].mxu0
        %v621 = vadd.f32 %v573, %v620
        %v622 = vpop.f32.mrb[0].mxu0
        %623 = vdwg.mxu0
        %v624 = vmax.f32 %v618, 0.0
        %v625 = vmax.f32 %v621, 0.0
        %626 = vrot.lane.b32.xlu0 %v624, 2
        %v627 = vpop.permute.xlu0 %626
        %628 = vrot.lane.b32.xlu0 %v625, 2
        %v629 = vpop.permute.xlu0 %628
        %v630 = vsel %vm552, %v627, 0.0
        %v631 = vsel %vm552, %v629, 0.0
        %v632 = vpack.c.bf16 %v631, %v630
        %633 = vst [vmem:[#allocation2] sm:$0xff] %v632
        %v634 = vpack.c.bf16 %v625, %v624
        %635 = vst [vmem:[#allocation2 + $0x8] sm:$0xff] %v634
        %v636 = vld [vmem:[%s6] sm:$0xf]
        %v637 = vld [vmem:[%s6 + $0x4] sm:$0xf]
        %v638 = vld [vmem:[#allocation2] sm:$0xff]
        %v639 = vld [vmem:[#allocation2 + $0x8] sm:$0xff]
        %v640 = vld [vmem:[%s1 + $0x40] sm:$0xff]
        %v641 = vld [vmem:[%s1 + $0x48] sm:$0xff]
        %643 = vset.pattern.permute.xlu0 0
        %644 = vperm.xlu0 %643, %v640
        %v645 = vpop.permute.xlu0 %644
        %648 = vset.pattern.permute.xlu0 0
        %649 = vperm.xlu0 %648, %v641
        %v650 = vpop.permute.xlu0 %649
        %v654 = vunpack.c.l.b16 %v636
        %v655 = vunpack.c.l.b16 %v637
        %v656 = vpack.c.b16 %v655, %v654
        %v658 = vsel %vm355, %v656, 0
        %660 = vmatprep.subr.bf16.mxu0 0
        %661 = vmatpush1.bf16.msra.mxu0 %v638
        %662 = vmatprep.subr.bf16.mxu0 0
        %663 = vmatpush1.bf16.msra.mxu0 %v639
        %664 = vmatprep.subr.bf16.mxu0 0
        %665 = vmatpush1.bf16.msra.mxu0 0
        %666 = vmatprep.subr.bf16.mxu0 0
        %667 = vmatpush1.bf16.msra.mxu0 0
        %668 = vmatprep.subr.bf16.mxu0 0
        %669 = vmatpush1.bf16.msra.mxu0 0
        %670 = vmatprep.subr.bf16.mxu0 0
        %671 = vmatpush1.bf16.msra.mxu0 0
        %672 = vmatprep.subr.bf16.mxu0 0
        %673 = vmatpush1.bf16.msra.mxu0 0
        %674 = vmatprep.subr.bf16.mxu0 0
        %675 = vmatpush1.bf16.msra.mxu0 0
        %676 = vmatprep.subr.bf16.mxu0 0
        %677 = vmatpush1.bf16.msra.mxu0 0
        %678 = vmatprep.subr.bf16.mxu0 0
        %679 = vmatpush1.bf16.msra.mxu0 0
        %680 = vmatprep.subr.bf16.mxu0 0
        %681 = vmatpush1.bf16.msra.mxu0 0
        %682 = vmatprep.subr.bf16.mxu0 0
        %683 = vmatpush1.bf16.msra.mxu0 0
        %684 = vmatprep.subr.bf16.mxu0 0
        %685 = vmatpush1.bf16.msra.mxu0 0
        %686 = vmatprep.subr.bf16.mxu0 0
        %687 = vmatpush1.bf16.msra.mxu0 0
        %688 = vmatprep.subr.bf16.mxu0 0
        %689 = vmatpush1.bf16.msra.mxu0 0
        %690 = vmatprep.subr.bf16.mxu0 0
        %691 = vmatpush1.bf16.msra.mxu0 0
        %692 = vmatprep.mubr.bf16.mxu0 0
        %693 = vmatmul.mubr.bf16.gmra.mrb[0].mxu0 %v658
        %v694 = vpop.f32.mrb[0].mxu0
        %v695 = vadd.f32 %v645, %v694
        %v696 = vpop.f32.mrb[0].mxu0
        %v697 = vpop.f32.mrb[0].mxu0
        %v698 = vadd.f32 %v650, %v697
        %v699 = vpop.f32.mrb[0].mxu0
        %700 = vdwg.mxu0
        %v701 = vmax.f32 %v695, 0.0
        %v702 = vmax.f32 %v698, 0.0
        %v703 = vadd.f32 %v701, %v545
        %v704 = vadd.f32 %v702, %v546
        %v705 = vmax.f32 %v703, 0.0
        %v706 = vmax.f32 %v704, 0.0
        %707 = vst [vmem:[%s314] sm:$0xff] %v705
        %708 = vst [vmem:[%s314 + $0x8] sm:$0xff] %v706
        %s709 = sand.u32 %s181, 1
        %s710 = scalar_lea.sflag [#allocation5], %s709
        %s711 = sand.u32 %s181, 1
        %s712 = smul.addr %s711, 16
        %s713 = scalar_lea.vmem [#allocation4], %s712
        // Predicated region
        $region87: #{tpu_custom_call.1} parent=81 // pred_check
          %p714 = pneg %p191
        $region88: #{tpu_custom_call.1} parent=81 // pred_check_branch
          %716 = sbr.rel (%p714) target = $region90
        $region89: #{tpu_custom_call.1} parent=81 // pred_region
          %s718 = ssub.s32 256, 256
          %719 = vsyncadd %s710, %s718
          %s720 = smul.addr %s21, 128
          %s721 = scalar_lea.hbm %s7, %s720
          %s722 = sshll.u32 %s713, 4
          %s723 = int_to_ptr.vmem [resolvable:$true] %s722
          %728 = dma.vmem_to_hbm [thread:$0]  %s723, 256, %s721, %s710, 128, 256, 8
        $region90: #{tpu_custom_call.1} parent=81 // pred_fallthru
          _
      $region82: #{tpu_custom_call.1} parent=5 // pred_fallthru
        _
      %p729 = scmp.le.s32.totalorder 2, %s16
      // Predicated region
      $region91: #{tpu_custom_call.1} parent=5 // pred_check
        %p730 = pneg %p729
      $region92: #{tpu_custom_call.1} parent=5 // pred_check_branch
        %732 = sbr.rel (%p730) target = $region94
      $region93: #{tpu_custom_call.1} parent=5 // pred_region
        %s733 = ssub.s32 %s16, 2
        // Predicated region
        $region95: #{tpu_custom_call.1} parent=93 // pred_check
          %p734 = pneg %p197
        $region96: #{tpu_custom_call.1} parent=93 // pred_check_branch
          %736 = sbr.rel (%p734) target = $region98
        $region97: #{tpu_custom_call.1} parent=93 // pred_region
          %s737 = sand.u32 %s182, 1
          %s738 = scalar_lea.sflag [#allocation5], %s737
          %s739 = sand.u32 %s182, 1
          %s740 = smul.addr %s739, 16
          %s741 = scalar_lea.vmem [#allocation4], %s740
          %742 = dma.done %s738, 256
        $region98: #{tpu_custom_call.1} parent=93 // pred_fallthru
          _
      $region94: #{tpu_custom_call.1} parent=5 // pred_fallthru
        _
    $region6: #{tpu_custom_call.1} parent=1 // loop_footer
      %s20 = sadd.s32 1, %s16
    $region7: #{tpu_custom_call.1} parent=1 // loop_footer_branch
      %15 = sbr.rel target = $region3
    $region8: #{tpu_custom_call.1} parent=1 // loop_exit
      _
    %743 = vsyncpa [#allocation5], 1
    %s744 = scalar_lea.sflag [#allocation5], 1
    %745 = vsyncpa %s744, 1

</llo_original>
